<compile_context>
chip_gen: v7x
topology: tpu7x:2x2x1
jax: 0.10.0
libtpu: 0.0.40
codegen_flags: <defaults>
</compile_context>

<pallas_src>
import jax
import jax.numpy as jnp
from jax import lax
from jax.experimental import pallas as pl
from jax.experimental.pallas import tpu as pltpu

# ---- problem sizes (small, consistent with the module) ----
B = 2          # batch
T = 8          # sequence length
C = 32         # n_channels
N_HEAD = 4     # n_head
HS = C // N_HEAD
EPS = 1e-5     # nn.LayerNorm default eps

# Row indices of the packed (9, C) small-parameter slab.
_BQ, _BK, _BV, _BO, _B2, _G1, _BE1, _G2, _BE2 = range(9)

# Lane offsets of the packed (C, 8C) big-weight slab (w1 first -> 128-lane aligned).
_W1_OFF = 0            # w1   : lanes [0,   4C)
_WQKV_OFF = 4 * C      # wqkv : lanes [4C,  7C)
_WO_OFF = 7 * C        # wo   : lanes [7C,  8C)


def _layernorm(z, gamma, beta):
    mu = jnp.mean(z, axis=-1, keepdims=True)
    var = jnp.mean((z - mu) ** 2, axis=-1, keepdims=True)
    return (z - mu) * lax.rsqrt(var + EPS) * gamma + beta


def attention_block_kernel(x_ref, wbig_ref, w2_ref, b1_ref, vecs_ref, o_ref):
    """Whole problem in one invocation; x_ref is the flattened (B*T, C) slab."""
    x = x_ref[...]                                        # (B*T, C)

    def vrow(i):                                          # (1, C) row of the packed slab
        return vecs_ref[pl.ds(i, 1), :]

    # ---- static lane slices of the packed big-weight slab ------------------------
    w1 = wbig_ref[:, _W1_OFF:_W1_OFF + 4 * C]             # (C, 4C), 128-lane aligned
    wqkv = wbig_ref[:, _WQKV_OFF:_WQKV_OFF + 3 * C]       # (C, 3C)
    wo = wbig_ref[:, _WO_OFF:_WO_OFF + C]                 # (C, C)

    # ---- fused Q|K|V projection: one MXU push instead of three -------------------
    qkv = jnp.dot(x, wqkv, preferred_element_type=jnp.float32)        # (B*T, 3C)
    scale = float(C) ** (-0.5)          # module scales by n_channels**-0.5, not head_size
    q = (qkv[:, 0 * C:1 * C] + vrow(_BQ)) * scale         # pre-scale once, full slab
    k = qkv[:, 1 * C:2 * C] + vrow(_BK)
    v = qkv[:, 2 * C:3 * C] + vrow(_BV)

    # ---- scores for all (batch, head) pairs, sublane-stacked ---------------------
    dn_qkT = (((1,), (1,)), ((), ()))   # contract last dims: q @ k^T w/o explicit transpose
    scores = []
    for b in range(B):
        r0 = b * T
        for h in range(N_HEAD):
            c0 = h * HS
            qh = q[r0:r0 + T, c0:c0 + HS]                 # (T, HS)
            kh = k[r0:r0 + T, c0:c0 + HS]
            scores.append(lax.dot_general(qh, kh, dn_qkT,
                                          preferred_element_type=jnp.float32))
    s_all = jnp.concatenate(scores, axis=0)               # (B*N_HEAD*T, T) sublane concat

    # ---- one batched softmax: single max / exp / sum / exact divide --------------
    s_all = s_all - jnp.max(s_all, axis=-1, keepdims=True)
    p_all = jnp.exp(s_all)
    p_all = p_all / jnp.sum(p_all, axis=-1, keepdims=True)

    # ---- p @ v per head; lane-concat heads, sublane-stack batches ----------------
    att_rows = []
    for b in range(B):
        r0 = b * T
        head_outs = []
        for h in range(N_HEAD):
            c0 = h * HS
            ph = p_all[(b * N_HEAD + h) * T:(b * N_HEAD + h + 1) * T, :]   # (T, T)
            vh = v[r0:r0 + T, c0:c0 + HS]                                   # (T, HS)
            head_outs.append(jnp.dot(ph, vh, preferred_element_type=jnp.float32))
        att_rows.append(jnp.concatenate(head_outs, axis=1))                # (T, C)
    att = jnp.concatenate(att_rows, axis=0)                                 # (B*T, C)

    # ---- single output projection on the concatenated attention slab -------------
    mh = jnp.dot(att, wo, preferred_element_type=jnp.float32) + vrow(_BO)

    # ---- residual + layernorm 1 ---------------------------------------------------
    inter = _layernorm(x + mh, vrow(_G1), vrow(_BE1))

    # ---- feedforward on x (Dropout = identity in eval) ----------------------------
    ff = jnp.dot(x, w1, preferred_element_type=jnp.float32) + b1_ref[...]
    ff = jnp.maximum(ff, 0.0)
    ff = jnp.dot(ff, w2_ref[...], preferred_element_type=jnp.float32) + vrow(_B2)

    # ---- residual + layernorm 2, single full-block store --------------------------
    o_ref[...] = _layernorm(ff + inter, vrow(_G2), vrow(_BE2))


def attention_block(x, params):
    """x: (B, T, C) float32; params: list in the order produced by init_params."""
    (wq, wk, wv, bq, bk, bv, wo, bo, w1, b1, w2, b2, g1, be1, g2, be2) = params
    Bx, Tx, Cx = x.shape

    # One-time packing at the XLA level (free relative to kernel cost):
    wqkv = jnp.concatenate([wq, wk, wv], axis=1)                               # (C, 3C)
    wbig = jnp.concatenate([w1, wqkv, wo], axis=1)                             # (C, 8C)
    vecs = jnp.concatenate([bq, bk, bv, bo, b2, g1, be1, g2, be2], axis=0)     # (9, C)
    x2 = x.reshape(Bx * Tx, Cx)                                                # flatten batch

    vmem = pl.BlockSpec(memory_space=pltpu.MemorySpace.VMEM)   # whole array in VMEM
    out = pl.pallas_call(
        attention_block_kernel,
        out_shape=jax.ShapeDtypeStruct((Bx * Tx, Cx), jnp.float32),
        in_specs=[vmem] * 5,
        out_specs=vmem,
    )(x2, wbig, w2, b1, vecs)
    return out.reshape(Bx, Tx, Cx)


def reference(x, params):
    (wq, wk, wv, bq, bk, bv, wo, bo, w1, b1, w2, b2, g1, be1, g2, be2) = params
    q = x @ wq + bq
    k = x @ wk + bk
    v = x @ wv + bv
    scale = float(C) ** (-0.5)
    outs = []
    for h in range(N_HEAD):
        sl = slice(h * HS, (h + 1) * HS)
        s = jnp.einsum("btd,bsd->bts", q[..., sl], k[..., sl]) * scale
        p = jax.nn.softmax(s, axis=-1)
        outs.append(jnp.einsum("bts,bsd->btd", p, v[..., sl]))
    att = jnp.concatenate(outs, axis=-1)
    mh = att @ wo + bo

    def ln(z, g, b_):
        mu = jnp.mean(z, axis=-1, keepdims=True)
        var = jnp.mean((z - mu) ** 2, axis=-1, keepdims=True)
        return (z - mu) / jnp.sqrt(var + EPS) * g + b_

    inter = ln(x + mh, g1, be1)
    ff = jnp.maximum(x @ w1 + b1, 0.0) @ w2 + b2
    return ln(ff + inter, g2, be2)


def init_params(key):
    ks = jax.random.split(key, 12)
    s = 0.1
    wq = s * jax.random.normal(ks[0], (C, C), jnp.float32)
    wk = s * jax.random.normal(ks[1], (C, C), jnp.float32)
    wv = s * jax.random.normal(ks[2], (C, C), jnp.float32)
    bq = s * jax.random.normal(ks[3], (1, C), jnp.float32)
    bk = s * jax.random.normal(ks[4], (1, C), jnp.float32)
    bv = s * jax.random.normal(ks[5], (1, C), jnp.float32)
    wo = s * jax.random.normal(ks[6], (C, C), jnp.float32)
    bo = s * jax.random.normal(ks[7], (1, C), jnp.float32)
    w1 = s * jax.random.normal(ks[8], (C, 4 * C), jnp.float32)
    b1 = s * jax.random.normal(ks[9], (1, 4 * C), jnp.float32)
    w2 = s * jax.random.normal(ks[10], (4 * C, C), jnp.float32)
    b2 = s * jax.random.normal(ks[11], (1, C), jnp.float32)
    g1 = jnp.ones((1, C), jnp.float32)
    be1 = jnp.zeros((1, C), jnp.float32)
    g2 = jnp.ones((1, C), jnp.float32)
    be2 = jnp.zeros((1, C), jnp.float32)
    return [wq, wk, wv, bq, bk, bv, wo, bo, w1, b1, w2, b2, g1, be1, g2, be2]


if __name__ == "__main__":
    key = jax.random.PRNGKey(0)
    kx, kp = jax.random.split(key)
    x = jax.random.normal(kx, (B, T, C), jnp.float32)
    params = init_params(kp)

    out = attention_block(x, params)
    out = jax.block_until_ready(out)

    ref = reference(x, params)
    assert out.shape == (B, T, C)
    # Exact softmax division + all-f32 math restored -> tight tolerance again.
    assert jnp.allclose(out, ref, atol=1e-4, rtol=1e-4), "mismatch vs JAX reference"

    print("KERNEL_OK")
</pallas_src>

<mosaic_0001>
module attributes {stable_mosaic.version = 11 : i64} {
  func.func @attention_block_kernel(%arg0: memref<16x32xf32, #tpu.memory_space<vmem>>, %arg1: memref<32x256xf32, #tpu.memory_space<vmem>>, %arg2: memref<128x32xf32, #tpu.memory_space<vmem>>, %arg3: memref<1x128xf32, #tpu.memory_space<vmem>>, %arg4: memref<9x32xf32, #tpu.memory_space<vmem>>, %arg5: memref<16x32xf32, #tpu.memory_space<vmem>>) attributes {dimension_semantics = [], scalar_prefetch = 0 : i64, scratch_operands = 0 : i64, tpu.core_type = #tpu.core_type<tc>} {
    %c0 = arith.constant 0 : index
    %c0_0 = arith.constant 0 : index
    %0 = vector.load %arg0[%c0, %c0_0] : memref<16x32xf32, #tpu.memory_space<vmem>>, vector<16x32xf32>
    %c0_1 = arith.constant 0 : index
    %c0_2 = arith.constant 0 : index
    %1 = vector.load %arg1[%c0_1, %c0_2] : memref<32x256xf32, #tpu.memory_space<vmem>>, vector<32x128xf32>
    %c0_3 = arith.constant 0 : index
    %c128 = arith.constant 128 : index
    %2 = vector.load %arg1[%c0_3, %c128] : memref<32x256xf32, #tpu.memory_space<vmem>>, vector<32x96xf32>
    %c0_4 = arith.constant 0 : index
    %c224 = arith.constant 224 : index
    %3 = vector.load %arg1[%c0_4, %c224] : memref<32x256xf32, #tpu.memory_space<vmem>>, vector<32x32xf32>
    %cst = arith.constant dense<0.000000e+00> : vector<16x96xf32>
    %4 = tpu.matmul %0, %2, %cst {dimension_numbers = #tpu.dot_dimension_numbers<[1], [0], [0], [1], [0, 0, 1, 1], [], []>} : vector<16x32xf32>, vector<32x96xf32>, vector<16x96xf32> -> vector<16x96xf32>
    %5 = vector.extract_strided_slice %4 {offsets = [0, 0], sizes = [16, 32], strides = [1, 1]} : vector<16x96xf32> to vector<16x32xf32>
    %c0_5 = arith.constant 0 : index
    %c0_6 = arith.constant 0 : index
    %6 = vector.load %arg4[%c0_5, %c0_6] : memref<9x32xf32, #tpu.memory_space<vmem>>, vector<1x32xf32>
    %7 = vector.broadcast %6 : vector<1x32xf32> to vector<16x32xf32>
    %8 = arith.addf %5, %7 : vector<16x32xf32>
    %cst_7 = arith.constant 0.176776692 : f32
    %9 = vector.broadcast %cst_7 : f32 to vector<16x32xf32>
    %10 = arith.mulf %8, %9 : vector<16x32xf32>
    %11 = vector.extract_strided_slice %4 {offsets = [0, 32], sizes = [16, 32], strides = [1, 1]} : vector<16x96xf32> to vector<16x32xf32>
    %c1 = arith.constant 1 : index
    %c0_8 = arith.constant 0 : index
    %12 = vector.load %arg4[%c1, %c0_8] : memref<9x32xf32, #tpu.memory_space<vmem>>, vector<1x32xf32>
    %13 = vector.broadcast %12 : vector<1x32xf32> to vector<16x32xf32>
    %14 = arith.addf %11, %13 : vector<16x32xf32>
    %15 = vector.extract_strided_slice %4 {offsets = [0, 64], sizes = [16, 32], strides = [1, 1]} : vector<16x96xf32> to vector<16x32xf32>
    %c2 = arith.constant 2 : index
    %c0_9 = arith.constant 0 : index
    %16 = vector.load %arg4[%c2, %c0_9] : memref<9x32xf32, #tpu.memory_space<vmem>>, vector<1x32xf32>
    %17 = vector.broadcast %16 : vector<1x32xf32> to vector<16x32xf32>
    %18 = arith.addf %15, %17 : vector<16x32xf32>
    %19 = vector.extract_strided_slice %10 {offsets = [0, 0], sizes = [8, 8], strides = [1, 1]} : vector<16x32xf32> to vector<8x8xf32>
    %20 = vector.extract_strided_slice %14 {offsets = [0, 0], sizes = [8, 8], strides = [1, 1]} : vector<16x32xf32> to vector<8x8xf32>
    %cst_10 = arith.constant dense<0.000000e+00> : vector<8x8xf32>
    %21 = tpu.matmul %19, %20, %cst_10 {dimension_numbers = #tpu.dot_dimension_numbers<[1], [1], [0], [0], [0, 0, 1, 0], [], []>} : vector<8x8xf32>, vector<8x8xf32>, vector<8x8xf32> -> vector<8x8xf32>
    %22 = vector.extract_strided_slice %10 {offsets = [0, 8], sizes = [8, 8], strides = [1, 1]} : vector<16x32xf32> to vector<8x8xf32>
    %23 = vector.extract_strided_slice %14 {offsets = [0, 8], sizes = [8, 8], strides = [1, 1]} : vector<16x32xf32> to vector<8x8xf32>
    %cst_11 = arith.constant dense<0.000000e+00> : vector<8x8xf32>
    %24 = tpu.matmul %22, %23, %cst_11 {dimension_numbers = #tpu.dot_dimension_numbers<[1], [1], [0], [0], [0, 0, 1, 0], [], []>} : vector<8x8xf32>, vector<8x8xf32>, vector<8x8xf32> -> vector<8x8xf32>
    %25 = vector.extract_strided_slice %10 {offsets = [0, 16], sizes = [8, 8], strides = [1, 1]} : vector<16x32xf32> to vector<8x8xf32>
    %26 = vector.extract_strided_slice %14 {offsets = [0, 16], sizes = [8, 8], strides = [1, 1]} : vector<16x32xf32> to vector<8x8xf32>
    %cst_12 = arith.constant dense<0.000000e+00> : vector<8x8xf32>
    %27 = tpu.matmul %25, %26, %cst_12 {dimension_numbers = #tpu.dot_dimension_numbers<[1], [1], [0], [0], [0, 0, 1, 0], [], []>} : vector<8x8xf32>, vector<8x8xf32>, vector<8x8xf32> -> vector<8x8xf32>
    %28 = vector.extract_strided_slice %10 {offsets = [0, 24], sizes = [8, 8], strides = [1, 1]} : vector<16x32xf32> to vector<8x8xf32>
    %29 = vector.extract_strided_slice %14 {offsets = [0, 24], sizes = [8, 8], strides = [1, 1]} : vector<16x32xf32> to vector<8x8xf32>
    %cst_13 = arith.constant dense<0.000000e+00> : vector<8x8xf32>
    %30 = tpu.matmul %28, %29, %cst_13 {dimension_numbers = #tpu.dot_dimension_numbers<[1], [1], [0], [0], [0, 0, 1, 0], [], []>} : vector<8x8xf32>, vector<8x8xf32>, vector<8x8xf32> -> vector<8x8xf32>
    %31 = vector.extract_strided_slice %10 {offsets = [8, 0], sizes = [8, 8], strides = [1, 1]} : vector<16x32xf32> to vector<8x8xf32>
    %32 = vector.extract_strided_slice %14 {offsets = [8, 0], sizes = [8, 8], strides = [1, 1]} : vector<16x32xf32> to vector<8x8xf32>
    %cst_14 = arith.constant dense<0.000000e+00> : vector<8x8xf32>
    %33 = tpu.matmul %31, %32, %cst_14 {dimension_numbers = #tpu.dot_dimension_numbers<[1], [1], [0], [0], [0, 0, 1, 0], [], []>} : vector<8x8xf32>, vector<8x8xf32>, vector<8x8xf32> -> vector<8x8xf32>
    %34 = vector.extract_strided_slice %10 {offsets = [8, 8], sizes = [8, 8], strides = [1, 1]} : vector<16x32xf32> to vector<8x8xf32>
    %35 = vector.extract_strided_slice %14 {offsets = [8, 8], sizes = [8, 8], strides = [1, 1]} : vector<16x32xf32> to vector<8x8xf32>
    %cst_15 = arith.constant dense<0.000000e+00> : vector<8x8xf32>
    %36 = tpu.matmul %34, %35, %cst_15 {dimension_numbers = #tpu.dot_dimension_numbers<[1], [1], [0], [0], [0, 0, 1, 0], [], []>} : vector<8x8xf32>, vector<8x8xf32>, vector<8x8xf32> -> vector<8x8xf32>
    %37 = vector.extract_strided_slice %10 {offsets = [8, 16], sizes = [8, 8], strides = [1, 1]} : vector<16x32xf32> to vector<8x8xf32>
    %38 = vector.extract_strided_slice %14 {offsets = [8, 16], sizes = [8, 8], strides = [1, 1]} : vector<16x32xf32> to vector<8x8xf32>
    %cst_16 = arith.constant dense<0.000000e+00> : vector<8x8xf32>
    %39 = tpu.matmul %37, %38, %cst_16 {dimension_numbers = #tpu.dot_dimension_numbers<[1], [1], [0], [0], [0, 0, 1, 0], [], []>} : vector<8x8xf32>, vector<8x8xf32>, vector<8x8xf32> -> vector<8x8xf32>
    %40 = vector.extract_strided_slice %10 {offsets = [8, 24], sizes = [8, 8], strides = [1, 1]} : vector<16x32xf32> to vector<8x8xf32>
    %41 = vector.extract_strided_slice %14 {offsets = [8, 24], sizes = [8, 8], strides = [1, 1]} : vector<16x32xf32> to vector<8x8xf32>
    %cst_17 = arith.constant dense<0.000000e+00> : vector<8x8xf32>
    %42 = tpu.matmul %40, %41, %cst_17 {dimension_numbers = #tpu.dot_dimension_numbers<[1], [1], [0], [0], [0, 0, 1, 0], [], []>} : vector<8x8xf32>, vector<8x8xf32>, vector<8x8xf32> -> vector<8x8xf32>
    %43 = tpu.concatenate %21, %24, %27, %30, %33, %36, %39, %42 in 0 : vector<8x8xf32>, vector<8x8xf32>, vector<8x8xf32>, vector<8x8xf32>, vector<8x8xf32>, vector<8x8xf32>, vector<8x8xf32>, vector<8x8xf32> -> vector<64x8xf32>
    %cst_18 = arith.constant dense<0xFF800000> : vector<64xf32>
    %44 = vector.multi_reduction <maximumf>, %43, %cst_18 [1] : vector<64x8xf32> to vector<64xf32>
    %45 = vector.shape_cast %44 : vector<64xf32> to vector<64x1xf32>
    %46 = vector.broadcast %45 : vector<64x1xf32> to vector<64x8xf32>
    %47 = arith.subf %43, %46 : vector<64x8xf32>
    %48 = math.exp %47 : vector<64x8xf32>
    %cst_19 = arith.constant dense<0.000000e+00> : vector<64xf32>
    %49 = vector.multi_reduction <add>, %48, %cst_19 [1] : vector<64x8xf32> to vector<64xf32>
    %50 = vector.shape_cast %49 : vector<64xf32> to vector<64x1xf32>
    %51 = vector.broadcast %50 : vector<64x1xf32> to vector<64x8xf32>
    %52 = arith.divf %48, %51 : vector<64x8xf32>
    %53 = vector.extract_strided_slice %52 {offsets = [0, 0], sizes = [8, 8], strides = [1, 1]} : vector<64x8xf32> to vector<8x8xf32>
    %54 = vector.extract_strided_slice %18 {offsets = [0, 0], sizes = [8, 8], strides = [1, 1]} : vector<16x32xf32> to vector<8x8xf32>
    %cst_20 = arith.constant dense<0.000000e+00> : vector<8x8xf32>
    %55 = tpu.matmul %53, %54, %cst_20 {dimension_numbers = #tpu.dot_dimension_numbers<[1], [0], [0], [1], [0, 0, 1, 1], [], []>} : vector<8x8xf32>, vector<8x8xf32>, vector<8x8xf32> -> vector<8x8xf32>
    %56 = vector.extract_strided_slice %52 {offsets = [8, 0], sizes = [8, 8], strides = [1, 1]} : vector<64x8xf32> to vector<8x8xf32>
    %57 = vector.extract_strided_slice %18 {offsets = [0, 8], sizes = [8, 8], strides = [1, 1]} : vector<16x32xf32> to vector<8x8xf32>
    %cst_21 = arith.constant dense<0.000000e+00> : vector<8x8xf32>
    %58 = tpu.matmul %56, %57, %cst_21 {dimension_numbers = #tpu.dot_dimension_numbers<[1], [0], [0], [1], [0, 0, 1, 1], [], []>} : vector<8x8xf32>, vector<8x8xf32>, vector<8x8xf32> -> vector<8x8xf32>
    %59 = vector.extract_strided_slice %52 {offsets = [16, 0], sizes = [8, 8], strides = [1, 1]} : vector<64x8xf32> to vector<8x8xf32>
    %60 = vector.extract_strided_slice %18 {offsets = [0, 16], sizes = [8, 8], strides = [1, 1]} : vector<16x32xf32> to vector<8x8xf32>
    %cst_22 = arith.constant dense<0.000000e+00> : vector<8x8xf32>
    %61 = tpu.matmul %59, %60, %cst_22 {dimension_numbers = #tpu.dot_dimension_numbers<[1], [0], [0], [1], [0, 0, 1, 1], [], []>} : vector<8x8xf32>, vector<8x8xf32>, vector<8x8xf32> -> vector<8x8xf32>
    %62 = vector.extract_strided_slice %52 {offsets = [24, 0], sizes = [8, 8], strides = [1, 1]} : vector<64x8xf32> to vector<8x8xf32>
    %63 = vector.extract_strided_slice %18 {offsets = [0, 24], sizes = [8, 8], strides = [1, 1]} : vector<16x32xf32> to vector<8x8xf32>
    %cst_23 = arith.constant dense<0.000000e+00> : vector<8x8xf32>
    %64 = tpu.matmul %62, %63, %cst_23 {dimension_numbers = #tpu.dot_dimension_numbers<[1], [0], [0], [1], [0, 0, 1, 1], [], []>} : vector<8x8xf32>, vector<8x8xf32>, vector<8x8xf32> -> vector<8x8xf32>
    %65 = tpu.concatenate %55, %58, %61, %64 in 1 : vector<8x8xf32>, vector<8x8xf32>, vector<8x8xf32>, vector<8x8xf32> -> vector<8x32xf32>
    %66 = vector.extract_strided_slice %52 {offsets = [32, 0], sizes = [8, 8], strides = [1, 1]} : vector<64x8xf32> to vector<8x8xf32>
    %67 = vector.extract_strided_slice %18 {offsets = [8, 0], sizes = [8, 8], strides = [1, 1]} : vector<16x32xf32> to vector<8x8xf32>
    %cst_24 = arith.constant dense<0.000000e+00> : vector<8x8xf32>
    %68 = tpu.matmul %66, %67, %cst_24 {dimension_numbers = #tpu.dot_dimension_numbers<[1], [0], [0], [1], [0, 0, 1, 1], [], []>} : vector<8x8xf32>, vector<8x8xf32>, vector<8x8xf32> -> vector<8x8xf32>
    %69 = vector.extract_strided_slice %52 {offsets = [40, 0], sizes = [8, 8], strides = [1, 1]} : vector<64x8xf32> to vector<8x8xf32>
    %70 = vector.extract_strided_slice %18 {offsets = [8, 8], sizes = [8, 8], strides = [1, 1]} : vector<16x32xf32> to vector<8x8xf32>
    %cst_25 = arith.constant dense<0.000000e+00> : vector<8x8xf32>
    %71 = tpu.matmul %69, %70, %cst_25 {dimension_numbers = #tpu.dot_dimension_numbers<[1], [0], [0], [1], [0, 0, 1, 1], [], []>} : vector<8x8xf32>, vector<8x8xf32>, vector<8x8xf32> -> vector<8x8xf32>
    %72 = vector.extract_strided_slice %52 {offsets = [48, 0], sizes = [8, 8], strides = [1, 1]} : vector<64x8xf32> to vector<8x8xf32>
    %73 = vector.extract_strided_slice %18 {offsets = [8, 16], sizes = [8, 8], strides = [1, 1]} : vector<16x32xf32> to vector<8x8xf32>
    %cst_26 = arith.constant dense<0.000000e+00> : vector<8x8xf32>
    %74 = tpu.matmul %72, %73, %cst_26 {dimension_numbers = #tpu.dot_dimension_numbers<[1], [0], [0], [1], [0, 0, 1, 1], [], []>} : vector<8x8xf32>, vector<8x8xf32>, vector<8x8xf32> -> vector<8x8xf32>
    %75 = vector.extract_strided_slice %52 {offsets = [56, 0], sizes = [8, 8], strides = [1, 1]} : vector<64x8xf32> to vector<8x8xf32>
    %76 = vector.extract_strided_slice %18 {offsets = [8, 24], sizes = [8, 8], strides = [1, 1]} : vector<16x32xf32> to vector<8x8xf32>
    %cst_27 = arith.constant dense<0.000000e+00> : vector<8x8xf32>
    %77 = tpu.matmul %75, %76, %cst_27 {dimension_numbers = #tpu.dot_dimension_numbers<[1], [0], [0], [1], [0, 0, 1, 1], [], []>} : vector<8x8xf32>, vector<8x8xf32>, vector<8x8xf32> -> vector<8x8xf32>
    %78 = tpu.concatenate %68, %71, %74, %77 in 1 : vector<8x8xf32>, vector<8x8xf32>, vector<8x8xf32>, vector<8x8xf32> -> vector<8x32xf32>
    %79 = tpu.concatenate %65, %78 in 0 : vector<8x32xf32>, vector<8x32xf32> -> vector<16x32xf32>
    %cst_28 = arith.constant dense<0.000000e+00> : vector<16x32xf32>
    %80 = tpu.matmul %79, %3, %cst_28 {dimension_numbers = #tpu.dot_dimension_numbers<[1], [0], [0], [1], [0, 0, 1, 1], [], []>} : vector<16x32xf32>, vector<32x32xf32>, vector<16x32xf32> -> vector<16x32xf32>
    %c3 = arith.constant 3 : index
    %c0_29 = arith.constant 0 : index
    %81 = vector.load %arg4[%c3, %c0_29] : memref<9x32xf32, #tpu.memory_space<vmem>>, vector<1x32xf32>
    %82 = vector.broadcast %81 : vector<1x32xf32> to vector<16x32xf32>
    %83 = arith.addf %80, %82 : vector<16x32xf32>
    %84 = arith.addf %0, %83 : vector<16x32xf32>
    %c5 = arith.constant 5 : index
    %c0_30 = arith.constant 0 : index
    %85 = vector.load %arg4[%c5, %c0_30] : memref<9x32xf32, #tpu.memory_space<vmem>>, vector<1x32xf32>
    %c6 = arith.constant 6 : index
    %c0_31 = arith.constant 0 : index
    %86 = vector.load %arg4[%c6, %c0_31] : memref<9x32xf32, #tpu.memory_space<vmem>>, vector<1x32xf32>
    %cst_32 = arith.constant dense<0.000000e+00> : vector<16xf32>
    %87 = vector.multi_reduction <add>, %84, %cst_32 [1] : vector<16x32xf32> to vector<16xf32>
    %88 = vector.shape_cast %87 : vector<16xf32> to vector<16x1xf32>
    %cst_33 = arith.constant 3.200000e+01 : f32
    %89 = vector.broadcast %cst_33 : f32 to vector<16x1xf32>
    %90 = arith.divf %88, %89 : vector<16x1xf32>
    %91 = vector.broadcast %90 : vector<16x1xf32> to vector<16x32xf32>
    %92 = arith.subf %84, %91 : vector<16x32xf32>
    %93 = arith.mulf %92, %92 : vector<16x32xf32>
    %cst_34 = arith.constant dense<0.000000e+00> : vector<16xf32>
    %94 = vector.multi_reduction <add>, %93, %cst_34 [1] : vector<16x32xf32> to vector<16xf32>
    %95 = vector.shape_cast %94 : vector<16xf32> to vector<16x1xf32>
    %cst_35 = arith.constant 3.200000e+01 : f32
    %96 = vector.broadcast %cst_35 : f32 to vector<16x1xf32>
    %97 = arith.divf %95, %96 : vector<16x1xf32>
    %98 = vector.broadcast %90 : vector<16x1xf32> to vector<16x32xf32>
    %99 = arith.subf %84, %98 : vector<16x32xf32>
    %cst_36 = arith.constant 9.99999974E-6 : f32
    %100 = vector.broadcast %cst_36 : f32 to vector<16x1xf32>
    %101 = arith.addf %97, %100 : vector<16x1xf32>
    %102 = math.rsqrt %101 : vector<16x1xf32>
    %103 = vector.broadcast %102 : vector<16x1xf32> to vector<16x32xf32>
    %104 = arith.mulf %99, %103 : vector<16x32xf32>
    %105 = vector.broadcast %85 : vector<1x32xf32> to vector<16x32xf32>
    %106 = arith.mulf %104, %105 : vector<16x32xf32>
    %107 = vector.broadcast %86 : vector<1x32xf32> to vector<16x32xf32>
    %108 = arith.addf %106, %107 : vector<16x32xf32>
    %cst_37 = arith.constant dense<0.000000e+00> : vector<16x128xf32>
    %109 = tpu.matmul %0, %1, %cst_37 {dimension_numbers = #tpu.dot_dimension_numbers<[1], [0], [0], [1], [0, 0, 1, 1], [], []>} : vector<16x32xf32>, vector<32x128xf32>, vector<16x128xf32> -> vector<16x128xf32>
    %c0_38 = arith.constant 0 : index
    %c0_39 = arith.constant 0 : index
    %110 = vector.load %arg3[%c0_38, %c0_39] : memref<1x128xf32, #tpu.memory_space<vmem>>, vector<1x128xf32>
    %111 = vector.broadcast %110 : vector<1x128xf32> to vector<16x128xf32>
    %112 = arith.addf %109, %111 : vector<16x128xf32>
    %cst_40 = arith.constant 0.000000e+00 : f32
    %113 = vector.broadcast %cst_40 : f32 to vector<16x128xf32>
    %114 = arith.maximumf %112, %113 : vector<16x128xf32>
    %c0_41 = arith.constant 0 : index
    %c0_42 = arith.constant 0 : index
    %115 = vector.load %arg2[%c0_41, %c0_42] : memref<128x32xf32, #tpu.memory_space<vmem>>, vector<128x32xf32>
    %cst_43 = arith.constant dense<0.000000e+00> : vector<16x32xf32>
    %116 = tpu.matmul %114, %115, %cst_43 {dimension_numbers = #tpu.dot_dimension_numbers<[1], [0], [0], [1], [0, 0, 1, 1], [], []>} : vector<16x128xf32>, vector<128x32xf32>, vector<16x32xf32> -> vector<16x32xf32>
    %c4 = arith.constant 4 : index
    %c0_44 = arith.constant 0 : index
    %117 = vector.load %arg4[%c4, %c0_44] : memref<9x32xf32, #tpu.memory_space<vmem>>, vector<1x32xf32>
    %118 = vector.broadcast %117 : vector<1x32xf32> to vector<16x32xf32>
    %119 = arith.addf %116, %118 : vector<16x32xf32>
    %120 = arith.addf %119, %108 : vector<16x32xf32>
    %c7 = arith.constant 7 : index
    %c0_45 = arith.constant 0 : index
    %121 = vector.load %arg4[%c7, %c0_45] : memref<9x32xf32, #tpu.memory_space<vmem>>, vector<1x32xf32>
    %c8 = arith.constant 8 : index
    %c0_46 = arith.constant 0 : index
    %122 = vector.load %arg4[%c8, %c0_46] : memref<9x32xf32, #tpu.memory_space<vmem>>, vector<1x32xf32>
    %cst_47 = arith.constant dense<0.000000e+00> : vector<16xf32>
    %123 = vector.multi_reduction <add>, %120, %cst_47 [1] : vector<16x32xf32> to vector<16xf32>
    %124 = vector.shape_cast %123 : vector<16xf32> to vector<16x1xf32>
    %cst_48 = arith.constant 3.200000e+01 : f32
    %125 = vector.broadcast %cst_48 : f32 to vector<16x1xf32>
    %126 = arith.divf %124, %125 : vector<16x1xf32>
    %127 = vector.broadcast %126 : vector<16x1xf32> to vector<16x32xf32>
    %128 = arith.subf %120, %127 : vector<16x32xf32>
    %129 = arith.mulf %128, %128 : vector<16x32xf32>
    %cst_49 = arith.constant dense<0.000000e+00> : vector<16xf32>
    %130 = vector.multi_reduction <add>, %129, %cst_49 [1] : vector<16x32xf32> to vector<16xf32>
    %131 = vector.shape_cast %130 : vector<16xf32> to vector<16x1xf32>
    %cst_50 = arith.constant 3.200000e+01 : f32
    %132 = vector.broadcast %cst_50 : f32 to vector<16x1xf32>
    %133 = arith.divf %131, %132 : vector<16x1xf32>
    %134 = vector.broadcast %126 : vector<16x1xf32> to vector<16x32xf32>
    %135 = arith.subf %120, %134 : vector<16x32xf32>
    %cst_51 = arith.constant 9.99999974E-6 : f32
    %136 = vector.broadcast %cst_51 : f32 to vector<16x1xf32>
    %137 = arith.addf %133, %136 : vector<16x1xf32>
    %138 = math.rsqrt %137 : vector<16x1xf32>
    %139 = vector.broadcast %138 : vector<16x1xf32> to vector<16x32xf32>
    %140 = arith.mulf %135, %139 : vector<16x32xf32>
    %141 = vector.broadcast %121 : vector<1x32xf32> to vector<16x32xf32>
    %142 = arith.mulf %140, %141 : vector<16x32xf32>
    %143 = vector.broadcast %122 : vector<1x32xf32> to vector<16x32xf32>
    %144 = arith.addf %142, %143 : vector<16x32xf32>
    %c0_52 = arith.constant 0 : index
    %c0_53 = arith.constant 0 : index
    %145 = vector.load %arg5[%c0_52, %c0_53] : memref<16x32xf32, #tpu.memory_space<vmem>>, vector<16x32xf32>
    tpu.vector_store %arg5[%c0_52, %c0_53], %144 {strides = array<i32>} : memref<16x32xf32, #tpu.memory_space<vmem>>, vector<16x32xf32>,
    return
  }
}

</mosaic_0001>

<llo_original>
// kernel: tpu_custom_call.1
$region0: #{tpu_custom_call.1}
  #allocation0 [shape = 'u32[]', space=smem, size = 0x4, offset = 0x4, fixed_abs, tag = 'smem constant byte address 0x4 - core index']
  #allocation1 [shape = 'u32[144,128]{1,0:T(1,128)}', space=vmem, size = 0x12000, scoped, tag = 'internal scratch']
  %s0 = inlined_call_operand.vmem [shape: f32[16,32], index: 0, kind: input, shape index: {}]
  %s1 = inlined_call_operand.vmem [shape: f32[32,256], index: 1, kind: input, shape index: {}]
  %s2 = inlined_call_operand.vmem [shape: f32[128,32], index: 2, kind: input, shape index: {}]
  %s3 = inlined_call_operand.vmem [shape: f32[1,128], index: 3, kind: input, shape index: {}]
  %s4 = inlined_call_operand.vmem [shape: f32[9,32], index: 4, kind: input, shape index: {}]
  %s5 = inlined_call_operand.hbm [shape: f32[16,32], index: 5, kind: output, shape index: {}]
  %s6 = sld [smem:[#allocation0]]
  $region30: #{tpu_custom_call.1} parent=0
    _
  %s8 = ssub.s32 1, %s6
  %s9 = scalar_select 0, %s8, %s6
  $region1: #{tpu_custom_call.1} parent=0
    #allocation2 [shape = 'u8[8192]{0}', space=vmem, size = 0x2000, scoped, tag = 'output window, operand 0, single buffered']
    #allocation3 [shape = 's32[1]{0}', space=sflag, size = 0x4, scoped, tag = 'scoped memory for tpu_custom_call.1']
    %10 = vsyncpa [#allocation3], 0
    // Predicated region
    $region2: #{tpu_custom_call.1} parent=1 // pred_check
      _
    $region3: #{tpu_custom_call.1} parent=1 // pred_check_branch
      %12 = sbr.rel (0) target = $region5
    $region4: #{tpu_custom_call.1} parent=1 // pred_region
      _
    $region5: #{tpu_custom_call.1} parent=1 // pred_fallthru
      _
    // Predicated region
    $region6: #{tpu_custom_call.1} parent=1 // pred_check
      _
    $region7: #{tpu_custom_call.1} parent=1 // pred_check_branch
      %14 = sbr.rel (0) target = $region9
    $region8: #{tpu_custom_call.1} parent=1 // pred_region
      _
    $region9: #{tpu_custom_call.1} parent=1 // pred_fallthru
      _
    // Predicated region
    $region10: #{tpu_custom_call.1} parent=1 // pred_check
      _
    $region11: #{tpu_custom_call.1} parent=1 // pred_check_branch
      %16 = sbr.rel (0) target = $region13
    $region12: #{tpu_custom_call.1} parent=1 // pred_region
      _
    $region13: #{tpu_custom_call.1} parent=1 // pred_fallthru
      _
    // Predicated region
    $region14: #{tpu_custom_call.1} parent=1 // pred_check
      _
    $region15: #{tpu_custom_call.1} parent=1 // pred_check_branch
      %18 = sbr.rel (0) target = $region17
    $region16: #{tpu_custom_call.1} parent=1 // pred_region
      _
    $region17: #{tpu_custom_call.1} parent=1 // pred_fallthru
      _
    // Predicated region
    $region18: #{tpu_custom_call.1} parent=1 // pred_check
      _
    $region19: #{tpu_custom_call.1} parent=1 // pred_check_branch
      %20 = sbr.rel (0) target = $region21
    $region20: #{tpu_custom_call.1} parent=1 // pred_region
      _
    $region21: #{tpu_custom_call.1} parent=1 // pred_fallthru
      _
    %v21 = vld [vmem:[%s0] sm:$0xff]
    %v22 = vld [vmem:[%s0 + $0x8] sm:$0xff]
    %v23 = vld [vmem:[%s1] sm:$0xff]
    %v24 = vld [vmem:[%s1 + $0x10] sm:$0xff]
    %v25 = vld [vmem:[%s1 + $0x20] sm:$0xff]
    %v26 = vld [vmem:[%s1 + $0x30] sm:$0xff]
    %v27 = vld [vmem:[%s1 + $0x8] sm:$0xff]
    %v28 = vld [vmem:[%s1 + $0x18] sm:$0xff]
    %v29 = vld [vmem:[%s1 + $0x28] sm:$0xff]
    %v30 = vld [vmem:[%s1 + $0x38] sm:$0xff]
    %vm31 = vcmask 261120
    %v33 = vsel %vm31, %v21, 0
    %v36 = vsel %vm31, %v22, 0
    %38 = vmatprep.subr.mxu0 0.0
    %39 = vmatpush1.msra.mxu0 %v27
    %40 = vmatprep.subr.mxu0 0.0
    %41 = vmatpush1.msra.mxu0 %v28
    %42 = vmatprep.subr.mxu0 0.0
    %43 = vmatpush1.msra.mxu0 %v29
    %44 = vmatprep.subr.mxu0 0.0
    %45 = vmatpush1.msra.mxu0 %v30
    %46 = vmatprep.subr.mxu0 0.0
    %47 = vmatpush1.msra.mxu0 0.0
    %48 = vmatprep.subr.mxu0 0.0
    %49 = vmatpush1.msra.mxu0 0.0
    %50 = vmatprep.subr.mxu0 0.0
    %51 = vmatpush1.msra.mxu0 0.0
    %52 = vmatprep.subr.mxu0 0.0
    %53 = vmatpush1.msra.mxu0 0.0
    %54 = vmatprep.subr.mxu0 0.0
    %55 = vmatpush1.msra.mxu0 0.0
    %56 = vmatprep.subr.mxu0 0.0
    %57 = vmatpush1.msra.mxu0 0.0
    %58 = vmatprep.subr.mxu0 0.0
    %59 = vmatpush1.msra.mxu0 0.0
    %60 = vmatprep.subr.mxu0 0.0
    %61 = vmatpush1.msra.mxu0 0.0
    %62 = vmatprep.subr.mxu0 0.0
    %63 = vmatpush1.msra.mxu0 0.0
    %64 = vmatprep.subr.mxu0 0.0
    %65 = vmatpush1.msra.mxu0 0.0
    %66 = vmatprep.subr.mxu0 0.0
    %67 = vmatpush1.msra.mxu0 0.0
    %68 = vmatprep.subr.mxu0 0.0
    %69 = vmatpush1.msra.mxu0 0.0
    %70 = vmatprep.subr.mxu0 0.0
    %71 = vmatpush1.msra.mxu0 0.0
    %72 = vmatprep.subr.mxu0 0.0
    %73 = vmatpush1.msra.mxu0 0.0
    %74 = vmatprep.subr.mxu0 0.0
    %75 = vmatpush1.msra.mxu0 0.0
    %76 = vmatprep.subr.mxu0 0.0
    %77 = vmatpush1.msra.mxu0 0.0
    %78 = vmatprep.subr.mxu0 0.0
    %79 = vmatpush1.msra.mxu0 0.0
    %80 = vmatprep.subr.mxu0 0.0
    %81 = vmatpush1.msra.mxu0 0.0
    %82 = vmatprep.subr.mxu0 0.0
    %83 = vmatpush1.msra.mxu0 0.0
    %84 = vmatprep.subr.mxu0 0.0
    %85 = vmatpush1.msra.mxu0 0.0
    %86 = vmatprep.subr.mxu0 0.0
    %87 = vmatpush1.msra.mxu0 0.0
    %88 = vmatprep.subr.mxu0 0.0
    %89 = vmatpush1.msra.mxu0 0.0
    %90 = vmatprep.subr.mxu0 0.0
    %91 = vmatpush1.msra.mxu0 0.0
    %92 = vmatprep.subr.mxu0 0.0
    %93 = vmatpush1.msra.mxu0 0.0
    %94 = vmatprep.subr.mxu0 0.0
    %95 = vmatpush1.msra.mxu0 0.0
    %96 = vmatprep.subr.mxu0 0.0
    %97 = vmatpush1.msra.mxu0 0.0
    %98 = vmatprep.subr.mxu0 0.0
    %99 = vmatpush1.msra.mxu0 0.0
    %100 = vmatprep.subr.mxu0 0.0
    %101 = vmatpush1.msra.mxu0 0.0
    %102 = vmatprep.mubr.f32.mxu0 0.0
    %103 = vmatmul.mubr.f32.gmra.mrb[0].mxu0 %v33
    %v104 = vpop.f32.mrb[0].mxu0
    %v105 = vadd.f32 0.0, %v104
    %v106 = vpop.f32.mrb[0].mxu0
    %107 = vmatprep.mubr.f32.mxu0 0.0
    %108 = vmatmul.mubr.f32.gmra.mrb[0].mxu0 %v36
    %v109 = vpop.f32.mrb[0].mxu0
    %v110 = vadd.f32 0.0, %v109
    %v111 = vpop.f32.mrb[0].mxu0
    %112 = vdwg.mxu0
    %v113 = vld [vmem:[%s4] sm:$0x1]
    %v114 = vlaneseq
    %v115 = vshrl.u32 %v114, 7
    %v116 = vsub.s32 0, %v115
    %v117 = vrot.slane %v113, %v116
    %v118 = vadd.f32 %v105, %v117
    %v119 = vadd.f32 %v110, %v117
    %v120 = vmul.f32 %v118, 0.17677669
    %v121 = vmul.f32 %v119, 0.17677669
    %v122 = vld [vmem:[%s4 + $0x1] sm:$0x1]
    %v123 = vlaneseq
    %v124 = vshrl.u32 %v123, 7
    %v125 = vsub.s32 0, %v124
    %v126 = vrot.slane %v122, %v125
    %128 = vrot.lane.b32.xlu0 %v126, 32
    %v129 = vpop.permute.xlu0 %128
    %v131 = vadd.f32 %v105, %v129
    %v132 = vadd.f32 %v110, %v129
    %v133 = vld [vmem:[%s4 + $0x2] sm:$0x1]
    %v134 = vlaneseq
    %v135 = vshrl.u32 %v134, 7
    %v136 = vsub.s32 0, %v135
    %v137 = vrot.slane %v133, %v136
    %139 = vrot.lane.b32.xlu0 %v137, 64
    %v140 = vpop.permute.xlu0 %139
    %v142 = vadd.f32 %v105, %v140
    %v143 = vadd.f32 %v110, %v140
    %145 = vrot.lane.b32.xlu0 %v131, 96
    %v146 = vpop.permute.xlu0 %145
    %vm147 = vcmask 64512
    %v149 = vsel %vm147, %v120, 0
    %v151 = vsel %vm147, %v146, 0
    %153 = vmatprep.subr.mxu0 0.0
    %154 = vmatpush1.xpose.msra.mxu0 %v151
    %155 = vmatprep.subr.mxu0 0.0
    %156 = vmatpush1.xpose.msra.mxu0 0.0
    %157 = vmatprep.subr.mxu0 0.0
    %158 = vmatpush1.xpose.msra.mxu0 0.0
    %159 = vmatprep.subr.mxu0 0.0
    %160 = vmatpush1.xpose.msra.mxu0 0.0
    %161 = vmatprep.subr.mxu0 0.0
    %162 = vmatpush1.xpose.msra.mxu0 0.0
    %163 = vmatprep.subr.mxu0 0.0
    %164 = vmatpush1.xpose.msra.mxu0 0.0
    %165 = vmatprep.subr.mxu0 0.0
    %166 = vmatpush1.xpose.msra.mxu0 0.0
    %167 = vmatprep.subr.mxu0 0.0
    %168 = vmatpush1.xpose.msra.mxu0 0.0
    %169 = vmatprep.subr.mxu0 0.0
    %170 = vmatpush1.xpose.msra.mxu0 0.0
    %171 = vmatprep.subr.mxu0 0.0
    %172 = vmatpush1.xpose.msra.mxu0 0.0
    %173 = vmatprep.subr.mxu0 0.0
    %174 = vmatpush1.xpose.msra.mxu0 0.0
    %175 = vmatprep.subr.mxu0 0.0
    %176 = vmatpush1.xpose.msra.mxu0 0.0
    %177 = vmatprep.subr.mxu0 0.0
    %178 = vmatpush1.xpose.msra.mxu0 0.0
    %179 = vmatprep.subr.mxu0 0.0
    %180 = vmatpush1.xpose.msra.mxu0 0.0
    %181 = vmatprep.subr.mxu0 0.0
    %182 = vmatpush1.xpose.msra.mxu0 0.0
    %183 = vmatprep.subr.mxu0 0.0
    %184 = vmatpush1.xpose.msra.mxu0 0.0
    %185 = vmatprep.subr.mxu0 0.0
    %186 = vmatpush1.xpose.msra.mxu0 0.0
    %187 = vmatprep.subr.mxu0 0.0
    %188 = vmatpush1.xpose.msra.mxu0 0.0
    %189 = vmatprep.subr.mxu0 0.0
    %190 = vmatpush1.xpose.msra.mxu0 0.0
    %191 = vmatprep.subr.mxu0 0.0
    %192 = vmatpush1.xpose.msra.mxu0 0.0
    %193 = vmatprep.subr.mxu0 0.0
    %194 = vmatpush1.xpose.msra.mxu0 0.0
    %195 = vmatprep.subr.mxu0 0.0
    %196 = vmatpush1.xpose.msra.mxu0 0.0
    %197 = vmatprep.subr.mxu0 0.0
    %198 = vmatpush1.xpose.msra.mxu0 0.0
    %199 = vmatprep.subr.mxu0 0.0
    %200 = vmatpush1.xpose.msra.mxu0 0.0
    %201 = vmatprep.subr.mxu0 0.0
    %202 = vmatpush1.xpose.msra.mxu0 0.0
    %203 = vmatprep.subr.mxu0 0.0
    %204 = vmatpush1.xpose.msra.mxu0 0.0
    %205 = vmatprep.subr.mxu0 0.0
    %206 = vmatpush1.xpose.msra.mxu0 0.0
    %207 = vmatprep.subr.mxu0 0.0
    %208 = vmatpush1.xpose.msra.mxu0 0.0
    %209 = vmatprep.subr.mxu0 0.0
    %210 = vmatpush1.xpose.msra.mxu0 0.0
    %211 = vmatprep.subr.mxu0 0.0
    %212 = vmatpush1.xpose.msra.mxu0 0.0
    %213 = vmatprep.subr.mxu0 0.0
    %214 = vmatpush1.xpose.msra.mxu0 0.0
    %215 = vmatprep.subr.mxu0 0.0
    %216 = vmatpush1.xpose.msra.mxu0 0.0
    %217 = vmatprep.mubr.f32.mxu0 0.0
    %218 = vmatmul.mubr.f32.gmra.mrb[0].mxu0 %v149
    %v219 = vpop.f32.mrb[0].mxu0
    %v220 = vadd.f32 0.0, %v219
    %v221 = vpop.f32.mrb[0].mxu0
    %222 = vdwg.mxu0
    %223 = vrot.lane.b32.xlu0 %v120, 120
    %v224 = vpop.permute.xlu0 %223
    %225 = vrot.lane.b32.xlu0 %v131, 88
    %v226 = vpop.permute.xlu0 %225
    %v227 = vsel %vm147, %v224, 0
    %v229 = vsel %vm147, %v226, 0
    %231 = vmatprep.subr.mxu0 0.0
    %232 = vmatpush1.xpose.msra.mxu0 %v229
    %233 = vmatprep.subr.mxu0 0.0
    %234 = vmatpush1.xpose.msra.mxu0 0.0
    %235 = vmatprep.subr.mxu0 0.0
    %236 = vmatpush1.xpose.msra.mxu0 0.0
    %237 = vmatprep.subr.mxu0 0.0
    %238 = vmatpush1.xpose.msra.mxu0 0.0
    %239 = vmatprep.subr.mxu0 0.0
    %240 = vmatpush1.xpose.msra.mxu0 0.0
    %241 = vmatprep.subr.mxu0 0.0
    %242 = vmatpush1.xpose.msra.mxu0 0.0
    %243 = vmatprep.subr.mxu0 0.0
    %244 = vmatpush1.xpose.msra.mxu0 0.0
    %245 = vmatprep.subr.mxu0 0.0
    %246 = vmatpush1.xpose.msra.mxu0 0.0
    %247 = vmatprep.subr.mxu0 0.0
    %248 = vmatpush1.xpose.msra.mxu0 0.0
    %249 = vmatprep.subr.mxu0 0.0
    %250 = vmatpush1.xpose.msra.mxu0 0.0
    %251 = vmatprep.subr.mxu0 0.0
    %252 = vmatpush1.xpose.msra.mxu0 0.0
    %253 = vmatprep.subr.mxu0 0.0
    %254 = vmatpush1.xpose.msra.mxu0 0.0
    %255 = vmatprep.subr.mxu0 0.0
    %256 = vmatpush1.xpose.msra.mxu0 0.0
    %257 = vmatprep.subr.mxu0 0.0
    %258 = vmatpush1.xpose.msra.mxu0 0.0
    %259 = vmatprep.subr.mxu0 0.0
    %260 = vmatpush1.xpose.msra.mxu0 0.0
    %261 = vmatprep.subr.mxu0 0.0
    %262 = vmatpush1.xpose.msra.mxu0 0.0
    %263 = vmatprep.subr.mxu0 0.0
    %264 = vmatpush1.xpose.msra.mxu0 0.0
    %265 = vmatprep.subr.mxu0 0.0
    %266 = vmatpush1.xpose.msra.mxu0 0.0
    %267 = vmatprep.subr.mxu0 0.0
    %268 = vmatpush1.xpose.msra.mxu0 0.0
    %269 = vmatprep.subr.mxu0 0.0
    %270 = vmatpush1.xpose.msra.mxu0 0.0
    %271 = vmatprep.subr.mxu0 0.0
    %272 = vmatpush1.xpose.msra.mxu0 0.0
    %273 = vmatprep.subr.mxu0 0.0
    %274 = vmatpush1.xpose.msra.mxu0 0.0
    %275 = vmatprep.subr.mxu0 0.0
    %276 = vmatpush1.xpose.msra.mxu0 0.0
    %277 = vmatprep.subr.mxu0 0.0
    %278 = vmatpush1.xpose.msra.mxu0 0.0
    %279 = vmatprep.subr.mxu0 0.0
    %280 = vmatpush1.xpose.msra.mxu0 0.0
    %281 = vmatprep.subr.mxu0 0.0
    %282 = vmatpush1.xpose.msra.mxu0 0.0
    %283 = vmatprep.subr.mxu0 0.0
    %284 = vmatpush1.xpose.msra.mxu0 0.0
    %285 = vmatprep.subr.mxu0 0.0
    %286 = vmatpush1.xpose.msra.mxu0 0.0
    %287 = vmatprep.subr.mxu0 0.0
    %288 = vmatpush1.xpose.msra.mxu0 0.0
    %289 = vmatprep.subr.mxu0 0.0
    %290 = vmatpush1.xpose.msra.mxu0 0.0
    %291 = vmatprep.subr.mxu0 0.0
    %292 = vmatpush1.xpose.msra.mxu0 0.0
    %293 = vmatprep.subr.mxu0 0.0
    %294 = vmatpush1.xpose.msra.mxu0 0.0
    %295 = vmatprep.mubr.f32.mxu0 0.0
    %296 = vmatmul.mubr.f32.gmra.mrb[0].mxu0 %v227
    %v297 = vpop.f32.mrb[0].mxu0
    %v298 = vadd.f32 0.0, %v297
    %v299 = vpop.f32.mrb[0].mxu0
    %300 = vdwg.mxu0
    %301 = vrot.lane.b32.xlu0 %v120, 112
    %v302 = vpop.permute.xlu0 %301
    %303 = vrot.lane.b32.xlu0 %v131, 80
    %v304 = vpop.permute.xlu0 %303
    %v305 = vsel %vm147, %v302, 0
    %v307 = vsel %vm147, %v304, 0
    %309 = vmatprep.subr.mxu0 0.0
    %310 = vmatpush1.xpose.msra.mxu0 %v307
    %311 = vmatprep.subr.mxu0 0.0
    %312 = vmatpush1.xpose.msra.mxu0 0.0
    %313 = vmatprep.subr.mxu0 0.0
    %314 = vmatpush1.xpose.msra.mxu0 0.0
    %315 = vmatprep.subr.mxu0 0.0
    %316 = vmatpush1.xpose.msra.mxu0 0.0
    %317 = vmatprep.subr.mxu0 0.0
    %318 = vmatpush1.xpose.msra.mxu0 0.0
    %319 = vmatprep.subr.mxu0 0.0
    %320 = vmatpush1.xpose.msra.mxu0 0.0
    %321 = vmatprep.subr.mxu0 0.0
    %322 = vmatpush1.xpose.msra.mxu0 0.0
    %323 = vmatprep.subr.mxu0 0.0
    %324 = vmatpush1.xpose.msra.mxu0 0.0
    %325 = vmatprep.subr.mxu0 0.0
    %326 = vmatpush1.xpose.msra.mxu0 0.0
    %327 = vmatprep.subr.mxu0 0.0
    %328 = vmatpush1.xpose.msra.mxu0 0.0
    %329 = vmatprep.subr.mxu0 0.0
    %330 = vmatpush1.xpose.msra.mxu0 0.0
    %331 = vmatprep.subr.mxu0 0.0
    %332 = vmatpush1.xpose.msra.mxu0 0.0
    %333 = vmatprep.subr.mxu0 0.0
    %334 = vmatpush1.xpose.msra.mxu0 0.0
    %335 = vmatprep.subr.mxu0 0.0
    %336 = vmatpush1.xpose.msra.mxu0 0.0
    %337 = vmatprep.subr.mxu0 0.0
    %338 = vmatpush1.xpose.msra.mxu0 0.0
    %339 = vmatprep.subr.mxu0 0.0
    %340 = vmatpush1.xpose.msra.mxu0 0.0
    %341 = vmatprep.subr.mxu0 0.0
    %342 = vmatpush1.xpose.msra.mxu0 0.0
    %343 = vmatprep.subr.mxu0 0.0
    %344 = vmatpush1.xpose.msra.mxu0 0.0
    %345 = vmatprep.subr.mxu0 0.0
    %346 = vmatpush1.xpose.msra.mxu0 0.0
    %347 = vmatprep.subr.mxu0 0.0
    %348 = vmatpush1.xpose.msra.mxu0 0.0
    %349 = vmatprep.subr.mxu0 0.0
    %350 = vmatpush1.xpose.msra.mxu0 0.0
    %351 = vmatprep.subr.mxu0 0.0
    %352 = vmatpush1.xpose.msra.mxu0 0.0
    %353 = vmatprep.subr.mxu0 0.0
    %354 = vmatpush1.xpose.msra.mxu0 0.0
    %355 = vmatprep.subr.mxu0 0.0
    %356 = vmatpush1.xpose.msra.mxu0 0.0
    %357 = vmatprep.subr.mxu0 0.0
    %358 = vmatpush1.xpose.msra.mxu0 0.0
    %359 = vmatprep.subr.mxu0 0.0
    %360 = vmatpush1.xpose.msra.mxu0 0.0
    %361 = vmatprep.subr.mxu0 0.0
    %362 = vmatpush1.xpose.msra.mxu0 0.0
    %363 = vmatprep.subr.mxu0 0.0
    %364 = vmatpush1.xpose.msra.mxu0 0.0
    %365 = vmatprep.subr.mxu0 0.0
    %366 = vmatpush1.xpose.msra.mxu0 0.0
    %367 = vmatprep.subr.mxu0 0.0
    %368 = vmatpush1.xpose.msra.mxu0 0.0
    %369 = vmatprep.subr.mxu0 0.0
    %370 = vmatpush1.xpose.msra.mxu0 0.0
    %371 = vmatprep.subr.mxu0 0.0
    %372 = vmatpush1.xpose.msra.mxu0 0.0
    %373 = vmatprep.mubr.f32.mxu0 0.0
    %374 = vmatmul.mubr.f32.gmra.mrb[0].mxu0 %v305
    %v375 = vpop.f32.mrb[0].mxu0
    %v376 = vadd.f32 0.0, %v375
    %v377 = vpop.f32.mrb[0].mxu0
    %378 = vdwg.mxu0
    %379 = vrot.lane.b32.xlu0 %v120, 104
    %v380 = vpop.permute.xlu0 %379
    %381 = vrot.lane.b32.xlu0 %v131, 72
    %v382 = vpop.permute.xlu0 %381
    %v383 = vsel %vm147, %v380, 0
    %v385 = vsel %vm147, %v382, 0
    %387 = vmatprep.subr.mxu0 0.0
    %388 = vmatpush1.xpose.msra.mxu0 %v385
    %389 = vmatprep.subr.mxu0 0.0
    %390 = vmatpush1.xpose.msra.mxu0 0.0
    %391 = vmatprep.subr.mxu0 0.0
    %392 = vmatpush1.xpose.msra.mxu0 0.0
    %393 = vmatprep.subr.mxu0 0.0
    %394 = vmatpush1.xpose.msra.mxu0 0.0
    %395 = vmatprep.subr.mxu0 0.0
    %396 = vmatpush1.xpose.msra.mxu0 0.0
    %397 = vmatprep.subr.mxu0 0.0
    %398 = vmatpush1.xpose.msra.mxu0 0.0
    %399 = vmatprep.subr.mxu0 0.0
    %400 = vmatpush1.xpose.msra.mxu0 0.0
    %401 = vmatprep.subr.mxu0 0.0
    %402 = vmatpush1.xpose.msra.mxu0 0.0
    %403 = vmatprep.subr.mxu0 0.0
    %404 = vmatpush1.xpose.msra.mxu0 0.0
    %405 = vmatprep.subr.mxu0 0.0
    %406 = vmatpush1.xpose.msra.mxu0 0.0
    %407 = vmatprep.subr.mxu0 0.0
    %408 = vmatpush1.xpose.msra.mxu0 0.0
    %409 = vmatprep.subr.mxu0 0.0
    %410 = vmatpush1.xpose.msra.mxu0 0.0
    %411 = vmatprep.subr.mxu0 0.0
    %412 = vmatpush1.xpose.msra.mxu0 0.0
    %413 = vmatprep.subr.mxu0 0.0
    %414 = vmatpush1.xpose.msra.mxu0 0.0
    %415 = vmatprep.subr.mxu0 0.0
    %416 = vmatpush1.xpose.msra.mxu0 0.0
    %417 = vmatprep.subr.mxu0 0.0
    %418 = vmatpush1.xpose.msra.mxu0 0.0
    %419 = vmatprep.subr.mxu0 0.0
    %420 = vmatpush1.xpose.msra.mxu0 0.0
    %421 = vmatprep.subr.mxu0 0.0
    %422 = vmatpush1.xpose.msra.mxu0 0.0
    %423 = vmatprep.subr.mxu0 0.0
    %424 = vmatpush1.xpose.msra.mxu0 0.0
    %425 = vmatprep.subr.mxu0 0.0
    %426 = vmatpush1.xpose.msra.mxu0 0.0
    %427 = vmatprep.subr.mxu0 0.0
    %428 = vmatpush1.xpose.msra.mxu0 0.0
    %429 = vmatprep.subr.mxu0 0.0
    %430 = vmatpush1.xpose.msra.mxu0 0.0
    %431 = vmatprep.subr.mxu0 0.0
    %432 = vmatpush1.xpose.msra.mxu0 0.0
    %433 = vmatprep.subr.mxu0 0.0
    %434 = vmatpush1.xpose.msra.mxu0 0.0
    %435 = vmatprep.subr.mxu0 0.0
    %436 = vmatpush1.xpose.msra.mxu0 0.0
    %437 = vmatprep.subr.mxu0 0.0
    %438 = vmatpush1.xpose.msra.mxu0 0.0
    %439 = vmatprep.subr.mxu0 0.0
    %440 = vmatpush1.xpose.msra.mxu0 0.0
    %441 = vmatprep.subr.mxu0 0.0
    %442 = vmatpush1.xpose.msra.mxu0 0.0
    %443 = vmatprep.subr.mxu0 0.0
    %444 = vmatpush1.xpose.msra.mxu0 0.0
    %445 = vmatprep.subr.mxu0 0.0
    %446 = vmatpush1.xpose.msra.mxu0 0.0
    %447 = vmatprep.subr.mxu0 0.0
    %448 = vmatpush1.xpose.msra.mxu0 0.0
    %449 = vmatprep.subr.mxu0 0.0
    %450 = vmatpush1.xpose.msra.mxu0 0.0
    %451 = vmatprep.mubr.f32.mxu0 0.0
    %452 = vmatmul.mubr.f32.gmra.mrb[0].mxu0 %v383
    %v453 = vpop.f32.mrb[0].mxu0
    %v454 = vadd.f32 0.0, %v453
    %v455 = vpop.f32.mrb[0].mxu0
    %456 = vdwg.mxu0
    %458 = vrot.lane.b32.xlu0 %v132, 96
    %v459 = vpop.permute.xlu0 %458
    %v461 = vsel %vm147, %v121, 0
    %v463 = vsel %vm147, %v459, 0
    %465 = vmatprep.subr.mxu0 0.0
    %466 = vmatpush1.xpose.msra.mxu0 %v463
    %467 = vmatprep.subr.mxu0 0.0
    %468 = vmatpush1.xpose.msra.mxu0 0.0
    %469 = vmatprep.subr.mxu0 0.0
    %470 = vmatpush1.xpose.msra.mxu0 0.0
    %471 = vmatprep.subr.mxu0 0.0
    %472 = vmatpush1.xpose.msra.mxu0 0.0
    %473 = vmatprep.subr.mxu0 0.0
    %474 = vmatpush1.xpose.msra.mxu0 0.0
    %475 = vmatprep.subr.mxu0 0.0
    %476 = vmatpush1.xpose.msra.mxu0 0.0
    %477 = vmatprep.subr.mxu0 0.0
    %478 = vmatpush1.xpose.msra.mxu0 0.0
    %479 = vmatprep.subr.mxu0 0.0
    %480 = vmatpush1.xpose.msra.mxu0 0.0
    %481 = vmatprep.subr.mxu0 0.0
    %482 = vmatpush1.xpose.msra.mxu0 0.0
    %483 = vmatprep.subr.mxu0 0.0
    %484 = vmatpush1.xpose.msra.mxu0 0.0
    %485 = vmatprep.subr.mxu0 0.0
    %486 = vmatpush1.xpose.msra.mxu0 0.0
    %487 = vmatprep.subr.mxu0 0.0
    %488 = vmatpush1.xpose.msra.mxu0 0.0
    %489 = vmatprep.subr.mxu0 0.0
    %490 = vmatpush1.xpose.msra.mxu0 0.0
    %491 = vmatprep.subr.mxu0 0.0
    %492 = vmatpush1.xpose.msra.mxu0 0.0
    %493 = vmatprep.subr.mxu0 0.0
    %494 = vmatpush1.xpose.msra.mxu0 0.0
    %495 = vmatprep.subr.mxu0 0.0
    %496 = vmatpush1.xpose.msra.mxu0 0.0
    %497 = vmatprep.subr.mxu0 0.0
    %498 = vmatpush1.xpose.msra.mxu0 0.0
    %499 = vmatprep.subr.mxu0 0.0
    %500 = vmatpush1.xpose.msra.mxu0 0.0
    %501 = vmatprep.subr.mxu0 0.0
    %502 = vmatpush1.xpose.msra.mxu0 0.0
    %503 = vmatprep.subr.mxu0 0.0
    %504 = vmatpush1.xpose.msra.mxu0 0.0
    %505 = vmatprep.subr.mxu0 0.0
    %506 = vmatpush1.xpose.msra.mxu0 0.0
    %507 = vmatprep.subr.mxu0 0.0
    %508 = vmatpush1.xpose.msra.mxu0 0.0
    %509 = vmatprep.subr.mxu0 0.0
    %510 = vmatpush1.xpose.msra.mxu0 0.0
    %511 = vmatprep.subr.mxu0 0.0
    %512 = vmatpush1.xpose.msra.mxu0 0.0
    %513 = vmatprep.subr.mxu0 0.0
    %514 = vmatpush1.xpose.msra.mxu0 0.0
    %515 = vmatprep.subr.mxu0 0.0
    %516 = vmatpush1.xpose.msra.mxu0 0.0
    %517 = vmatprep.subr.mxu0 0.0
    %518 = vmatpush1.xpose.msra.mxu0 0.0
    %519 = vmatprep.subr.mxu0 0.0
    %520 = vmatpush1.xpose.msra.mxu0 0.0
    %521 = vmatprep.subr.mxu0 0.0
    %522 = vmatpush1.xpose.msra.mxu0 0.0
    %523 = vmatprep.subr.mxu0 0.0
    %524 = vmatpush1.xpose.msra.mxu0 0.0
    %525 = vmatprep.subr.mxu0 0.0
    %526 = vmatpush1.xpose.msra.mxu0 0.0
    %527 = vmatprep.subr.mxu0 0.0
    %528 = vmatpush1.xpose.msra.mxu0 0.0
    %529 = vmatprep.mubr.f32.mxu0 0.0
    %530 = vmatmul.mubr.f32.gmra.mrb[0].mxu0 %v461
    %v531 = vpop.f32.mrb[0].mxu0
    %v532 = vadd.f32 0.0, %v531
    %v533 = vpop.f32.mrb[0].mxu0
    %534 = vdwg.mxu0
    %535 = vrot.lane.b32.xlu0 %v121, 120
    %v536 = vpop.permute.xlu0 %535
    %537 = vrot.lane.b32.xlu0 %v132, 88
    %v538 = vpop.permute.xlu0 %537
    %v539 = vsel %vm147, %v536, 0
    %v541 = vsel %vm147, %v538, 0
    %543 = vmatprep.subr.mxu0 0.0
    %544 = vmatpush1.xpose.msra.mxu0 %v541
    %545 = vmatprep.subr.mxu0 0.0
    %546 = vmatpush1.xpose.msra.mxu0 0.0
    %547 = vmatprep.subr.mxu0 0.0
    %548 = vmatpush1.xpose.msra.mxu0 0.0
    %549 = vmatprep.subr.mxu0 0.0
    %550 = vmatpush1.xpose.msra.mxu0 0.0
    %551 = vmatprep.subr.mxu0 0.0
    %552 = vmatpush1.xpose.msra.mxu0 0.0
    %553 = vmatprep.subr.mxu0 0.0
    %554 = vmatpush1.xpose.msra.mxu0 0.0
    %555 = vmatprep.subr.mxu0 0.0
    %556 = vmatpush1.xpose.msra.mxu0 0.0
    %557 = vmatprep.subr.mxu0 0.0
    %558 = vmatpush1.xpose.msra.mxu0 0.0
    %559 = vmatprep.subr.mxu0 0.0
    %560 = vmatpush1.xpose.msra.mxu0 0.0
    %561 = vmatprep.subr.mxu0 0.0
    %562 = vmatpush1.xpose.msra.mxu0 0.0
    %563 = vmatprep.subr.mxu0 0.0
    %564 = vmatpush1.xpose.msra.mxu0 0.0
    %565 = vmatprep.subr.mxu0 0.0
    %566 = vmatpush1.xpose.msra.mxu0 0.0
    %567 = vmatprep.subr.mxu0 0.0
    %568 = vmatpush1.xpose.msra.mxu0 0.0
    %569 = vmatprep.subr.mxu0 0.0
    %570 = vmatpush1.xpose.msra.mxu0 0.0
    %571 = vmatprep.subr.mxu0 0.0
    %572 = vmatpush1.xpose.msra.mxu0 0.0
    %573 = vmatprep.subr.mxu0 0.0
    %574 = vmatpush1.xpose.msra.mxu0 0.0
    %575 = vmatprep.subr.mxu0 0.0
    %576 = vmatpush1.xpose.msra.mxu0 0.0
    %577 = vmatprep.subr.mxu0 0.0
    %578 = vmatpush1.xpose.msra.mxu0 0.0
    %579 = vmatprep.subr.mxu0 0.0
    %580 = vmatpush1.xpose.msra.mxu0 0.0
    %581 = vmatprep.subr.mxu0 0.0
    %582 = vmatpush1.xpose.msra.mxu0 0.0
    %583 = vmatprep.subr.mxu0 0.0
    %584 = vmatpush1.xpose.msra.mxu0 0.0
    %585 = vmatprep.subr.mxu0 0.0
    %586 = vmatpush1.xpose.msra.mxu0 0.0
    %587 = vmatprep.subr.mxu0 0.0
    %588 = vmatpush1.xpose.msra.mxu0 0.0
    %589 = vmatprep.subr.mxu0 0.0
    %590 = vmatpush1.xpose.msra.mxu0 0.0
    %591 = vmatprep.subr.mxu0 0.0
    %592 = vmatpush1.xpose.msra.mxu0 0.0
    %593 = vmatprep.subr.mxu0 0.0
    %594 = vmatpush1.xpose.msra.mxu0 0.0
    %595 = vmatprep.subr.mxu0 0.0
    %596 = vmatpush1.xpose.msra.mxu0 0.0
    %597 = vmatprep.subr.mxu0 0.0
    %598 = vmatpush1.xpose.msra.mxu0 0.0
    %599 = vmatprep.subr.mxu0 0.0
    %600 = vmatpush1.xpose.msra.mxu0 0.0
    %601 = vmatprep.subr.mxu0 0.0
    %602 = vmatpush1.xpose.msra.mxu0 0.0
    %603 = vmatprep.subr.mxu0 0.0
    %604 = vmatpush1.xpose.msra.mxu0 0.0
    %605 = vmatprep.subr.mxu0 0.0
    %606 = vmatpush1.xpose.msra.mxu0 0.0
    %607 = vmatprep.mubr.f32.mxu0 0.0
    %608 = vmatmul.mubr.f32.gmra.mrb[0].mxu0 %v539
    %v609 = vpop.f32.mrb[0].mxu0
    %v610 = vadd.f32 0.0, %v609
    %v611 = vpop.f32.mrb[0].mxu0
    %612 = vdwg.mxu0
    %613 = vrot.lane.b32.xlu0 %v121, 112
    %v614 = vpop.permute.xlu0 %613
    %615 = vrot.lane.b32.xlu0 %v132, 80
    %v616 = vpop.permute.xlu0 %615
    %v617 = vsel %vm147, %v614, 0
    %v619 = vsel %vm147, %v616, 0
    %621 = vmatprep.subr.mxu0 0.0
    %622 = vmatpush1.xpose.msra.mxu0 %v619
    %623 = vmatprep.subr.mxu0 0.0
    %624 = vmatpush1.xpose.msra.mxu0 0.0
    %625 = vmatprep.subr.mxu0 0.0
    %626 = vmatpush1.xpose.msra.mxu0 0.0
    %627 = vmatprep.subr.mxu0 0.0
    %628 = vmatpush1.xpose.msra.mxu0 0.0
    %629 = vmatprep.subr.mxu0 0.0
    %630 = vmatpush1.xpose.msra.mxu0 0.0
    %631 = vmatprep.subr.mxu0 0.0
    %632 = vmatpush1.xpose.msra.mxu0 0.0
    %633 = vmatprep.subr.mxu0 0.0
    %634 = vmatpush1.xpose.msra.mxu0 0.0
    %635 = vmatprep.subr.mxu0 0.0
    %636 = vmatpush1.xpose.msra.mxu0 0.0
    %637 = vmatprep.subr.mxu0 0.0
    %638 = vmatpush1.xpose.msra.mxu0 0.0
    %639 = vmatprep.subr.mxu0 0.0
    %640 = vmatpush1.xpose.msra.mxu0 0.0
    %641 = vmatprep.subr.mxu0 0.0
    %642 = vmatpush1.xpose.msra.mxu0 0.0
    %643 = vmatprep.subr.mxu0 0.0
    %644 = vmatpush1.xpose.msra.mxu0 0.0
    %645 = vmatprep.subr.mxu0 0.0
    %646 = vmatpush1.xpose.msra.mxu0 0.0
    %647 = vmatprep.subr.mxu0 0.0
    %648 = vmatpush1.xpose.msra.mxu0 0.0
    %649 = vmatprep.subr.mxu0 0.0
    %650 = vmatpush1.xpose.msra.mxu0 0.0
    %651 = vmatprep.subr.mxu0 0.0
    %652 = vmatpush1.xpose.msra.mxu0 0.0
    %653 = vmatprep.subr.mxu0 0.0
    %654 = vmatpush1.xpose.msra.mxu0 0.0
    %655 = vmatprep.subr.mxu0 0.0
    %656 = vmatpush1.xpose.msra.mxu0 0.0
    %657 = vmatprep.subr.mxu0 0.0
    %658 = vmatpush1.xpose.msra.mxu0 0.0
    %659 = vmatprep.subr.mxu0 0.0
    %660 = vmatpush1.xpose.msra.mxu0 0.0
    %661 = vmatprep.subr.mxu0 0.0
    %662 = vmatpush1.xpose.msra.mxu0 0.0
    %663 = vmatprep.subr.mxu0 0.0
    %664 = vmatpush1.xpose.msra.mxu0 0.0
    %665 = vmatprep.subr.mxu0 0.0
    %666 = vmatpush1.xpose.msra.mxu0 0.0
    %667 = vmatprep.subr.mxu0 0.0
    %668 = vmatpush1.xpose.msra.mxu0 0.0
    %669 = vmatprep.subr.mxu0 0.0
    %670 = vmatpush1.xpose.msra.mxu0 0.0
    %671 = vmatprep.subr.mxu0 0.0
    %672 = vmatpush1.xpose.msra.mxu0 0.0
    %673 = vmatprep.subr.mxu0 0.0
    %674 = vmatpush1.xpose.msra.mxu0 0.0
    %675 = vmatprep.subr.mxu0 0.0
    %676 = vmatpush1.xpose.msra.mxu0 0.0
    %677 = vmatprep.subr.mxu0 0.0
    %678 = vmatpush1.xpose.msra.mxu0 0.0
    %679 = vmatprep.subr.mxu0 0.0
    %680 = vmatpush1.xpose.msra.mxu0 0.0
    %681 = vmatprep.subr.mxu0 0.0
    %682 = vmatpush1.xpose.msra.mxu0 0.0
    %683 = vmatprep.subr.mxu0 0.0
    %684 = vmatpush1.xpose.msra.mxu0 0.0
    %685 = vmatprep.mubr.f32.mxu0 0.0
    %686 = vmatmul.mubr.f32.gmra.mrb[0].mxu0 %v617
    %v687 = vpop.f32.mrb[0].mxu0
    %v688 = vadd.f32 0.0, %v687
    %v689 = vpop.f32.mrb[0].mxu0
    %690 = vdwg.mxu0
    %691 = vrot.lane.b32.xlu0 %v121, 104
    %v692 = vpop.permute.xlu0 %691
    %693 = vrot.lane.b32.xlu0 %v132, 72
    %v694 = vpop.permute.xlu0 %693
    %v695 = vsel %vm147, %v692, 0
    %v697 = vsel %vm147, %v694, 0
    %699 = vmatprep.subr.mxu0 0.0
    %700 = vmatpush1.xpose.msra.mxu0 %v697
    %701 = vmatprep.subr.mxu0 0.0
    %702 = vmatpush1.xpose.msra.mxu0 0.0
    %703 = vmatprep.subr.mxu0 0.0
    %704 = vmatpush1.xpose.msra.mxu0 0.0
    %705 = vmatprep.subr.mxu0 0.0
    %706 = vmatpush1.xpose.msra.mxu0 0.0
    %707 = vmatprep.subr.mxu0 0.0
    %708 = vmatpush1.xpose.msra.mxu0 0.0
    %709 = vmatprep.subr.mxu0 0.0
    %710 = vmatpush1.xpose.msra.mxu0 0.0
    %711 = vmatprep.subr.mxu0 0.0
    %712 = vmatpush1.xpose.msra.mxu0 0.0
    %713 = vmatprep.subr.mxu0 0.0
    %714 = vmatpush1.xpose.msra.mxu0 0.0
    %715 = vmatprep.subr.mxu0 0.0
    %716 = vmatpush1.xpose.msra.mxu0 0.0
    %717 = vmatprep.subr.mxu0 0.0
    %718 = vmatpush1.xpose.msra.mxu0 0.0
    %719 = vmatprep.subr.mxu0 0.0
    %720 = vmatpush1.xpose.msra.mxu0 0.0
    %721 = vmatprep.subr.mxu0 0.0
    %722 = vmatpush1.xpose.msra.mxu0 0.0
    %723 = vmatprep.subr.mxu0 0.0
    %724 = vmatpush1.xpose.msra.mxu0 0.0
    %725 = vmatprep.subr.mxu0 0.0
    %726 = vmatpush1.xpose.msra.mxu0 0.0
    %727 = vmatprep.subr.mxu0 0.0
    %728 = vmatpush1.xpose.msra.mxu0 0.0
    %729 = vmatprep.subr.mxu0 0.0
    %730 = vmatpush1.xpose.msra.mxu0 0.0
    %731 = vmatprep.subr.mxu0 0.0
    %732 = vmatpush1.xpose.msra.mxu0 0.0
    %733 = vmatprep.subr.mxu0 0.0
    %734 = vmatpush1.xpose.msra.mxu0 0.0
    %735 = vmatprep.subr.mxu0 0.0
    %736 = vmatpush1.xpose.msra.mxu0 0.0
    %737 = vmatprep.subr.mxu0 0.0
    %738 = vmatpush1.xpose.msra.mxu0 0.0
    %739 = vmatprep.subr.mxu0 0.0
    %740 = vmatpush1.xpose.msra.mxu0 0.0
    %741 = vmatprep.subr.mxu0 0.0
    %742 = vmatpush1.xpose.msra.mxu0 0.0
    %743 = vmatprep.subr.mxu0 0.0
    %744 = vmatpush1.xpose.msra.mxu0 0.0
    %745 = vmatprep.subr.mxu0 0.0
    %746 = vmatpush1.xpose.msra.mxu0 0.0
    %747 = vmatprep.subr.mxu0 0.0
    %748 = vmatpush1.xpose.msra.mxu0 0.0
    %749 = vmatprep.subr.mxu0 0.0
    %750 = vmatpush1.xpose.msra.mxu0 0.0
    %751 = vmatprep.subr.mxu0 0.0
    %752 = vmatpush1.xpose.msra.mxu0 0.0
    %753 = vmatprep.subr.mxu0 0.0
    %754 = vmatpush1.xpose.msra.mxu0 0.0
    %755 = vmatprep.subr.mxu0 0.0
    %756 = vmatpush1.xpose.msra.mxu0 0.0
    %757 = vmatprep.subr.mxu0 0.0
    %758 = vmatpush1.xpose.msra.mxu0 0.0
    %759 = vmatprep.subr.mxu0 0.0
    %760 = vmatpush1.xpose.msra.mxu0 0.0
    %761 = vmatprep.subr.mxu0 0.0
    %762 = vmatpush1.xpose.msra.mxu0 0.0
    %763 = vmatprep.mubr.f32.mxu0 0.0
    %764 = vmatmul.mubr.f32.gmra.mrb[0].mxu0 %v695
    %v765 = vpop.f32.mrb[0].mxu0
    %v766 = vadd.f32 0.0, %v765
    %v767 = vpop.f32.mrb[0].mxu0
    %768 = vdwg.mxu0
    %v769 = vsel %vm147, %v220, -inf
    %770 = vmax.xlane.f32.xlu0 %v769
    %v771 = vpop.xlane.xlu0 %770
    %v772 = vsel %vm147, %v298, -inf
    %773 = vmax.xlane.f32.xlu0 %v772
    %v774 = vpop.xlane.xlu0 %773
    %v775 = vsel %vm147, %v376, -inf
    %776 = vmax.xlane.f32.xlu0 %v775
    %v777 = vpop.xlane.xlu0 %776
    %v778 = vsel %vm147, %v454, -inf
    %779 = vmax.xlane.f32.xlu0 %v778
    %v780 = vpop.xlane.xlu0 %779
    %v781 = vsel %vm147, %v532, -inf
    %782 = vmax.xlane.f32.xlu0 %v781
    %v783 = vpop.xlane.xlu0 %782
    %v784 = vsel %vm147, %v610, -inf
    %785 = vmax.xlane.f32.xlu0 %v784
    %v786 = vpop.xlane.xlu0 %785
    %v787 = vsel %vm147, %v688, -inf
    %788 = vmax.xlane.f32.xlu0 %v787
    %v789 = vpop.xlane.xlu0 %788
    %v790 = vsel %vm147, %v766, -inf
    %791 = vmax.xlane.f32.xlu0 %v790
    %v792 = vpop.xlane.xlu0 %791
    %v793 = vsub.f32 %v220, %v771
    %v794 = vsub.f32 %v298, %v774
    %v795 = vsub.f32 %v376, %v777
    %v796 = vsub.f32 %v454, %v780
    %v797 = vsub.f32 %v532, %v783
    %v798 = vsub.f32 %v610, %v786
    %v799 = vsub.f32 %v688, %v789
    %v800 = vsub.f32 %v766, %v792
    %v801 = vmul.f32 %v793, 1.442695
    %v802 = vpow.pop %v801
    %v803 = vmul.f32 %v794, 1.442695
    %v804 = vpow.pop %v803
    %v805 = vmul.f32 %v795, 1.442695
    %v806 = vpow.pop %v805
    %v807 = vmul.f32 %v796, 1.442695
    %v808 = vpow.pop %v807
    %v809 = vmul.f32 %v797, 1.442695
    %v810 = vpow.pop %v809
    %v811 = vmul.f32 %v798, 1.442695
    %v812 = vpow.pop %v811
    %v813 = vmul.f32 %v799, 1.442695
    %v814 = vpow.pop %v813
    %v815 = vmul.f32 %v800, 1.442695
    %v816 = vpow.pop %v815
    %v817 = vsel %vm147, %v802, 0.0
    %818 = vadd.xlane.f32.xlu0 %v817
    %v819 = vpop.xlane.xlu0 %818
    %v820 = vsel %vm147, %v804, 0.0
    %821 = vadd.xlane.f32.xlu0 %v820
    %v822 = vpop.xlane.xlu0 %821
    %v823 = vsel %vm147, %v806, 0.0
    %824 = vadd.xlane.f32.xlu0 %v823
    %v825 = vpop.xlane.xlu0 %824
    %v826 = vsel %vm147, %v808, 0.0
    %827 = vadd.xlane.f32.xlu0 %v826
    %v828 = vpop.xlane.xlu0 %827
    %v829 = vsel %vm147, %v810, 0.0
    %830 = vadd.xlane.f32.xlu0 %v829
    %v831 = vpop.xlane.xlu0 %830
    %v832 = vsel %vm147, %v812, 0.0
    %833 = vadd.xlane.f32.xlu0 %v832
    %v834 = vpop.xlane.xlu0 %833
    %v835 = vsel %vm147, %v814, 0.0
    %836 = vadd.xlane.f32.xlu0 %v835
    %v837 = vpop.xlane.xlu0 %836
    %v838 = vsel %vm147, %v816, 0.0
    %839 = vadd.xlane.f32.xlu0 %v838
    %v840 = vpop.xlane.xlu0 %839
    %v841 = vrcp.pop %v819
    %v842 = vmul.f32 %v802, %v841
    %v843 = vrcp.pop %v822
    %v844 = vmul.f32 %v804, %v843
    %v845 = vrcp.pop %v825
    %v846 = vmul.f32 %v806, %v845
    %v847 = vrcp.pop %v828
    %v848 = vmul.f32 %v808, %v847
    %v849 = vrcp.pop %v831
    %v850 = vmul.f32 %v810, %v849
    %v851 = vrcp.pop %v834
    %v852 = vmul.f32 %v812, %v851
    %v853 = vrcp.pop %v837
    %v854 = vmul.f32 %v814, %v853
    %v855 = vrcp.pop %v840
    %v856 = vmul.f32 %v816, %v855
    %858 = vrot.lane.b32.xlu0 %v142, 64
    %v859 = vpop.permute.xlu0 %858
    %v862 = vsel %vm147, %v842, 0
    %864 = vmatprep.subr.mxu0 0.0
    %865 = vmatpush1.msra.mxu0 %v859
    %866 = vmatprep.subr.mxu0 0.0
    %867 = vmatpush1.msra.mxu0 0.0
    %868 = vmatprep.subr.mxu0 0.0
    %869 = vmatpush1.msra.mxu0 0.0
    %870 = vmatprep.subr.mxu0 0.0
    %871 = vmatpush1.msra.mxu0 0.0
    %872 = vmatprep.subr.mxu0 0.0
    %873 = vmatpush1.msra.mxu0 0.0
    %874 = vmatprep.subr.mxu0 0.0
    %875 = vmatpush1.msra.mxu0 0.0
    %876 = vmatprep.subr.mxu0 0.0
    %877 = vmatpush1.msra.mxu0 0.0
    %878 = vmatprep.subr.mxu0 0.0
    %879 = vmatpush1.msra.mxu0 0.0
    %880 = vmatprep.subr.mxu0 0.0
    %881 = vmatpush1.msra.mxu0 0.0
    %882 = vmatprep.subr.mxu0 0.0
    %883 = vmatpush1.msra.mxu0 0.0
    %884 = vmatprep.subr.mxu0 0.0
    %885 = vmatpush1.msra.mxu0 0.0
    %886 = vmatprep.subr.mxu0 0.0
    %887 = vmatpush1.msra.mxu0 0.0
    %888 = vmatprep.subr.mxu0 0.0
    %889 = vmatpush1.msra.mxu0 0.0
    %890 = vmatprep.subr.mxu0 0.0
    %891 = vmatpush1.msra.mxu0 0.0
    %892 = vmatprep.subr.mxu0 0.0
    %893 = vmatpush1.msra.mxu0 0.0
    %894 = vmatprep.subr.mxu0 0.0
    %895 = vmatpush1.msra.mxu0 0.0
    %896 = vmatprep.subr.mxu0 0.0
    %897 = vmatpush1.msra.mxu0 0.0
    %898 = vmatprep.subr.mxu0 0.0
    %899 = vmatpush1.msra.mxu0 0.0
    %900 = vmatprep.subr.mxu0 0.0
    %901 = vmatpush1.msra.mxu0 0.0
    %902 = vmatprep.subr.mxu0 0.0
    %903 = vmatpush1.msra.mxu0 0.0
    %904 = vmatprep.subr.mxu0 0.0
    %905 = vmatpush1.msra.mxu0 0.0
    %906 = vmatprep.subr.mxu0 0.0
    %907 = vmatpush1.msra.mxu0 0.0
    %908 = vmatprep.subr.mxu0 0.0
    %909 = vmatpush1.msra.mxu0 0.0
    %910 = vmatprep.subr.mxu0 0.0
    %911 = vmatpush1.msra.mxu0 0.0
    %912 = vmatprep.subr.mxu0 0.0
    %913 = vmatpush1.msra.mxu0 0.0
    %914 = vmatprep.subr.mxu0 0.0
    %915 = vmatpush1.msra.mxu0 0.0
    %916 = vmatprep.subr.mxu0 0.0
    %917 = vmatpush1.msra.mxu0 0.0
    %918 = vmatprep.subr.mxu0 0.0
    %919 = vmatpush1.msra.mxu0 0.0
    %920 = vmatprep.subr.mxu0 0.0
    %921 = vmatpush1.msra.mxu0 0.0
    %922 = vmatprep.subr.mxu0 0.0
    %923 = vmatpush1.msra.mxu0 0.0
    %924 = vmatprep.subr.mxu0 0.0
    %925 = vmatpush1.msra.mxu0 0.0
    %926 = vmatprep.subr.mxu0 0.0
    %927 = vmatpush1.msra.mxu0 0.0
    %928 = vmatprep.mubr.f32.mxu0 0.0
    %929 = vmatmul.mubr.f32.gmra.mrb[0].mxu0 %v862
    %v930 = vpop.f32.mrb[0].mxu0
    %v931 = vadd.f32 0.0, %v930
    %v932 = vpop.f32.mrb[0].mxu0
    %933 = vdwg.mxu0
    %934 = vrot.lane.b32.xlu0 %v142, 56
    %v935 = vpop.permute.xlu0 %934
    %v938 = vsel %vm147, %v844, 0
    %940 = vmatprep.subr.mxu0 0.0
    %941 = vmatpush1.msra.mxu0 %v935
    %942 = vmatprep.subr.mxu0 0.0
    %943 = vmatpush1.msra.mxu0 0.0
    %944 = vmatprep.subr.mxu0 0.0
    %945 = vmatpush1.msra.mxu0 0.0
    %946 = vmatprep.subr.mxu0 0.0
    %947 = vmatpush1.msra.mxu0 0.0
    %948 = vmatprep.subr.mxu0 0.0
    %949 = vmatpush1.msra.mxu0 0.0
    %950 = vmatprep.subr.mxu0 0.0
    %951 = vmatpush1.msra.mxu0 0.0
    %952 = vmatprep.subr.mxu0 0.0
    %953 = vmatpush1.msra.mxu0 0.0
    %954 = vmatprep.subr.mxu0 0.0
    %955 = vmatpush1.msra.mxu0 0.0
    %956 = vmatprep.subr.mxu0 0.0
    %957 = vmatpush1.msra.mxu0 0.0
    %958 = vmatprep.subr.mxu0 0.0
    %959 = vmatpush1.msra.mxu0 0.0
    %960 = vmatprep.subr.mxu0 0.0
    %961 = vmatpush1.msra.mxu0 0.0
    %962 = vmatprep.subr.mxu0 0.0
    %963 = vmatpush1.msra.mxu0 0.0
    %964 = vmatprep.subr.mxu0 0.0
    %965 = vmatpush1.msra.mxu0 0.0
    %966 = vmatprep.subr.mxu0 0.0
    %967 = vmatpush1.msra.mxu0 0.0
    %968 = vmatprep.subr.mxu0 0.0
    %969 = vmatpush1.msra.mxu0 0.0
    %970 = vmatprep.subr.mxu0 0.0
    %971 = vmatpush1.msra.mxu0 0.0
    %972 = vmatprep.subr.mxu0 0.0
    %973 = vmatpush1.msra.mxu0 0.0
    %974 = vmatprep.subr.mxu0 0.0
    %975 = vmatpush1.msra.mxu0 0.0
    %976 = vmatprep.subr.mxu0 0.0
    %977 = vmatpush1.msra.mxu0 0.0
    %978 = vmatprep.subr.mxu0 0.0
    %979 = vmatpush1.msra.mxu0 0.0
    %980 = vmatprep.subr.mxu0 0.0
    %981 = vmatpush1.msra.mxu0 0.0
    %982 = vmatprep.subr.mxu0 0.0
    %983 = vmatpush1.msra.mxu0 0.0
    %984 = vmatprep.subr.mxu0 0.0
    %985 = vmatpush1.msra.mxu0 0.0
    %986 = vmatprep.subr.mxu0 0.0
    %987 = vmatpush1.msra.mxu0 0.0
    %988 = vmatprep.subr.mxu0 0.0
    %989 = vmatpush1.msra.mxu0 0.0
    %990 = vmatprep.subr.mxu0 0.0
    %991 = vmatpush1.msra.mxu0 0.0
    %992 = vmatprep.subr.mxu0 0.0
    %993 = vmatpush1.msra.mxu0 0.0
    %994 = vmatprep.subr.mxu0 0.0
    %995 = vmatpush1.msra.mxu0 0.0
    %996 = vmatprep.subr.mxu0 0.0
    %997 = vmatpush1.msra.mxu0 0.0
    %998 = vmatprep.subr.mxu0 0.0
    %999 = vmatpush1.msra.mxu0 0.0
    %1000 = vmatprep.subr.mxu0 0.0
    %1001 = vmatpush1.msra.mxu0 0.0
    %1002 = vmatprep.subr.mxu0 0.0
    %1003 = vmatpush1.msra.mxu0 0.0
    %1004 = vmatprep.mubr.f32.mxu0 0.0
    %1005 = vmatmul.mubr.f32.gmra.mrb[0].mxu0 %v938
    %v1006 = vpop.f32.mrb[0].mxu0
    %v1007 = vadd.f32 0.0, %v1006
    %v1008 = vpop.f32.mrb[0].mxu0
    %1009 = vdwg.mxu0
    %1010 = vrot.lane.b32.xlu0 %v142, 48
    %v1011 = vpop.permute.xlu0 %1010
    %v1014 = vsel %vm147, %v846, 0
    %1016 = vmatprep.subr.mxu0 0.0
    %1017 = vmatpush1.msra.mxu0 %v1011
    %1018 = vmatprep.subr.mxu0 0.0
    %1019 = vmatpush1.msra.mxu0 0.0
    %1020 = vmatprep.subr.mxu0 0.0
    %1021 = vmatpush1.msra.mxu0 0.0
    %1022 = vmatprep.subr.mxu0 0.0
    %1023 = vmatpush1.msra.mxu0 0.0
    %1024 = vmatprep.subr.mxu0 0.0
    %1025 = vmatpush1.msra.mxu0 0.0
    %1026 = vmatprep.subr.mxu0 0.0
    %1027 = vmatpush1.msra.mxu0 0.0
    %1028 = vmatprep.subr.mxu0 0.0
    %1029 = vmatpush1.msra.mxu0 0.0
    %1030 = vmatprep.subr.mxu0 0.0
    %1031 = vmatpush1.msra.mxu0 0.0
    %1032 = vmatprep.subr.mxu0 0.0
    %1033 = vmatpush1.msra.mxu0 0.0
    %1034 = vmatprep.subr.mxu0 0.0
    %1035 = vmatpush1.msra.mxu0 0.0
    %1036 = vmatprep.subr.mxu0 0.0
    %1037 = vmatpush1.msra.mxu0 0.0
    %1038 = vmatprep.subr.mxu0 0.0
    %1039 = vmatpush1.msra.mxu0 0.0
    %1040 = vmatprep.subr.mxu0 0.0
    %1041 = vmatpush1.msra.mxu0 0.0
    %1042 = vmatprep.subr.mxu0 0.0
    %1043 = vmatpush1.msra.mxu0 0.0
    %1044 = vmatprep.subr.mxu0 0.0
    %1045 = vmatpush1.msra.mxu0 0.0
    %1046 = vmatprep.subr.mxu0 0.0
    %1047 = vmatpush1.msra.mxu0 0.0
    %1048 = vmatprep.subr.mxu0 0.0
    %1049 = vmatpush1.msra.mxu0 0.0
    %1050 = vmatprep.subr.mxu0 0.0
    %1051 = vmatpush1.msra.mxu0 0.0
    %1052 = vmatprep.subr.mxu0 0.0
    %1053 = vmatpush1.msra.mxu0 0.0
    %1054 = vmatprep.subr.mxu0 0.0
    %1055 = vmatpush1.msra.mxu0 0.0
    %1056 = vmatprep.subr.mxu0 0.0
    %1057 = vmatpush1.msra.mxu0 0.0
    %1058 = vmatprep.subr.mxu0 0.0
    %1059 = vmatpush1.msra.mxu0 0.0
    %1060 = vmatprep.subr.mxu0 0.0
    %1061 = vmatpush1.msra.mxu0 0.0
    %1062 = vmatprep.subr.mxu0 0.0
    %1063 = vmatpush1.msra.mxu0 0.0
    %1064 = vmatprep.subr.mxu0 0.0
    %1065 = vmatpush1.msra.mxu0 0.0
    %1066 = vmatprep.subr.mxu0 0.0
    %1067 = vmatpush1.msra.mxu0 0.0
    %1068 = vmatprep.subr.mxu0 0.0
    %1069 = vmatpush1.msra.mxu0 0.0
    %1070 = vmatprep.subr.mxu0 0.0
    %1071 = vmatpush1.msra.mxu0 0.0
    %1072 = vmatprep.subr.mxu0 0.0
    %1073 = vmatpush1.msra.mxu0 0.0
    %1074 = vmatprep.subr.mxu0 0.0
    %1075 = vmatpush1.msra.mxu0 0.0
    %1076 = vmatprep.subr.mxu0 0.0
    %1077 = vmatpush1.msra.mxu0 0.0
    %1078 = vmatprep.subr.mxu0 0.0
    %1079 = vmatpush1.msra.mxu0 0.0
    %1080 = vmatprep.mubr.f32.mxu0 0.0
    %1081 = vmatmul.mubr.f32.gmra.mrb[0].mxu0 %v1014
    %v1082 = vpop.f32.mrb[0].mxu0
    %v1083 = vadd.f32 0.0, %v1082
    %v1084 = vpop.f32.mrb[0].mxu0
    %1085 = vdwg.mxu0
    %1086 = vrot.lane.b32.xlu0 %v142, 40
    %v1087 = vpop.permute.xlu0 %1086
    %v1090 = vsel %vm147, %v848, 0
    %1092 = vmatprep.subr.mxu0 0.0
    %1093 = vmatpush1.msra.mxu0 %v1087
    %1094 = vmatprep.subr.mxu0 0.0
    %1095 = vmatpush1.msra.mxu0 0.0
    %1096 = vmatprep.subr.mxu0 0.0
    %1097 = vmatpush1.msra.mxu0 0.0
    %1098 = vmatprep.subr.mxu0 0.0
    %1099 = vmatpush1.msra.mxu0 0.0
    %1100 = vmatprep.subr.mxu0 0.0
    %1101 = vmatpush1.msra.mxu0 0.0
    %1102 = vmatprep.subr.mxu0 0.0
    %1103 = vmatpush1.msra.mxu0 0.0
    %1104 = vmatprep.subr.mxu0 0.0
    %1105 = vmatpush1.msra.mxu0 0.0
    %1106 = vmatprep.subr.mxu0 0.0
    %1107 = vmatpush1.msra.mxu0 0.0
    %1108 = vmatprep.subr.mxu0 0.0
    %1109 = vmatpush1.msra.mxu0 0.0
    %1110 = vmatprep.subr.mxu0 0.0
    %1111 = vmatpush1.msra.mxu0 0.0
    %1112 = vmatprep.subr.mxu0 0.0
    %1113 = vmatpush1.msra.mxu0 0.0
    %1114 = vmatprep.subr.mxu0 0.0
    %1115 = vmatpush1.msra.mxu0 0.0
    %1116 = vmatprep.subr.mxu0 0.0
    %1117 = vmatpush1.msra.mxu0 0.0
    %1118 = vmatprep.subr.mxu0 0.0
    %1119 = vmatpush1.msra.mxu0 0.0
    %1120 = vmatprep.subr.mxu0 0.0
    %1121 = vmatpush1.msra.mxu0 0.0
    %1122 = vmatprep.subr.mxu0 0.0
    %1123 = vmatpush1.msra.mxu0 0.0
    %1124 = vmatprep.subr.mxu0 0.0
    %1125 = vmatpush1.msra.mxu0 0.0
    %1126 = vmatprep.subr.mxu0 0.0
    %1127 = vmatpush1.msra.mxu0 0.0
    %1128 = vmatprep.subr.mxu0 0.0
    %1129 = vmatpush1.msra.mxu0 0.0
    %1130 = vmatprep.subr.mxu0 0.0
    %1131 = vmatpush1.msra.mxu0 0.0
    %1132 = vmatprep.subr.mxu0 0.0
    %1133 = vmatpush1.msra.mxu0 0.0
    %1134 = vmatprep.subr.mxu0 0.0
    %1135 = vmatpush1.msra.mxu0 0.0
    %1136 = vmatprep.subr.mxu0 0.0
    %1137 = vmatpush1.msra.mxu0 0.0
    %1138 = vmatprep.subr.mxu0 0.0
    %1139 = vmatpush1.msra.mxu0 0.0
    %1140 = vmatprep.subr.mxu0 0.0
    %1141 = vmatpush1.msra.mxu0 0.0
    %1142 = vmatprep.subr.mxu0 0.0
    %1143 = vmatpush1.msra.mxu0 0.0
    %1144 = vmatprep.subr.mxu0 0.0
    %1145 = vmatpush1.msra.mxu0 0.0
    %1146 = vmatprep.subr.mxu0 0.0
    %1147 = vmatpush1.msra.mxu0 0.0
    %1148 = vmatprep.subr.mxu0 0.0
    %1149 = vmatpush1.msra.mxu0 0.0
    %1150 = vmatprep.subr.mxu0 0.0
    %1151 = vmatpush1.msra.mxu0 0.0
    %1152 = vmatprep.subr.mxu0 0.0
    %1153 = vmatpush1.msra.mxu0 0.0
    %1154 = vmatprep.subr.mxu0 0.0
    %1155 = vmatpush1.msra.mxu0 0.0
    %1156 = vmatprep.mubr.f32.mxu0 0.0
    %1157 = vmatmul.mubr.f32.gmra.mrb[0].mxu0 %v1090
    %v1158 = vpop.f32.mrb[0].mxu0
    %v1159 = vadd.f32 0.0, %v1158
    %v1160 = vpop.f32.mrb[0].mxu0
    %1161 = vdwg.mxu0
    %1163 = vrot.lane.b32.xlu0 %v1007, 8
    %v1164 = vpop.permute.xlu0 %1163
    %1167 = vrot.lane.b32.xlu0 %v1083, 16
    %v1168 = vpop.permute.xlu0 %1167
    %1171 = vrot.lane.b32.xlu0 %v1159, 24
    %v1172 = vpop.permute.xlu0 %1171
    %v1174 = vsel %vm147, %v931, %v1164
    %vm1175 = vcmask 130048
    %v1176 = vsel %vm1175, %v1174, %v1168
    %vm1177 = vcmask 195584
    %v1178 = vsel %vm1177, %v1176, %v1172
    %1180 = vrot.lane.b32.xlu0 %v143, 64
    %v1181 = vpop.permute.xlu0 %1180
    %v1184 = vsel %vm147, %v850, 0
    %1186 = vmatprep.subr.mxu0 0.0
    %1187 = vmatpush1.msra.mxu0 %v1181
    %1188 = vmatprep.subr.mxu0 0.0
    %1189 = vmatpush1.msra.mxu0 0.0
    %1190 = vmatprep.subr.mxu0 0.0
    %1191 = vmatpush1.msra.mxu0 0.0
    %1192 = vmatprep.subr.mxu0 0.0
    %1193 = vmatpush1.msra.mxu0 0.0
    %1194 = vmatprep.subr.mxu0 0.0
    %1195 = vmatpush1.msra.mxu0 0.0
    %1196 = vmatprep.subr.mxu0 0.0
    %1197 = vmatpush1.msra.mxu0 0.0
    %1198 = vmatprep.subr.mxu0 0.0
    %1199 = vmatpush1.msra.mxu0 0.0
    %1200 = vmatprep.subr.mxu0 0.0
    %1201 = vmatpush1.msra.mxu0 0.0
    %1202 = vmatprep.subr.mxu0 0.0
    %1203 = vmatpush1.msra.mxu0 0.0
    %1204 = vmatprep.subr.mxu0 0.0
    %1205 = vmatpush1.msra.mxu0 0.0
    %1206 = vmatprep.subr.mxu0 0.0
    %1207 = vmatpush1.msra.mxu0 0.0
    %1208 = vmatprep.subr.mxu0 0.0
    %1209 = vmatpush1.msra.mxu0 0.0
    %1210 = vmatprep.subr.mxu0 0.0
    %1211 = vmatpush1.msra.mxu0 0.0
    %1212 = vmatprep.subr.mxu0 0.0
    %1213 = vmatpush1.msra.mxu0 0.0
    %1214 = vmatprep.subr.mxu0 0.0
    %1215 = vmatpush1.msra.mxu0 0.0
    %1216 = vmatprep.subr.mxu0 0.0
    %1217 = vmatpush1.msra.mxu0 0.0
    %1218 = vmatprep.subr.mxu0 0.0
    %1219 = vmatpush1.msra.mxu0 0.0
    %1220 = vmatprep.subr.mxu0 0.0
    %1221 = vmatpush1.msra.mxu0 0.0
    %1222 = vmatprep.subr.mxu0 0.0
    %1223 = vmatpush1.msra.mxu0 0.0
    %1224 = vmatprep.subr.mxu0 0.0
    %1225 = vmatpush1.msra.mxu0 0.0
    %1226 = vmatprep.subr.mxu0 0.0
    %1227 = vmatpush1.msra.mxu0 0.0
    %1228 = vmatprep.subr.mxu0 0.0
    %1229 = vmatpush1.msra.mxu0 0.0
    %1230 = vmatprep.subr.mxu0 0.0
    %1231 = vmatpush1.msra.mxu0 0.0
    %1232 = vmatprep.subr.mxu0 0.0
    %1233 = vmatpush1.msra.mxu0 0.0
    %1234 = vmatprep.subr.mxu0 0.0
    %1235 = vmatpush1.msra.mxu0 0.0
    %1236 = vmatprep.subr.mxu0 0.0
    %1237 = vmatpush1.msra.mxu0 0.0
    %1238 = vmatprep.subr.mxu0 0.0
    %1239 = vmatpush1.msra.mxu0 0.0
    %1240 = vmatprep.subr.mxu0 0.0
    %1241 = vmatpush1.msra.mxu0 0.0
    %1242 = vmatprep.subr.mxu0 0.0
    %1243 = vmatpush1.msra.mxu0 0.0
    %1244 = vmatprep.subr.mxu0 0.0
    %1245 = vmatpush1.msra.mxu0 0.0
    %1246 = vmatprep.subr.mxu0 0.0
    %1247 = vmatpush1.msra.mxu0 0.0
    %1248 = vmatprep.subr.mxu0 0.0
    %1249 = vmatpush1.msra.mxu0 0.0
    %1250 = vmatprep.mubr.f32.mxu0 0.0
    %1251 = vmatmul.mubr.f32.gmra.mrb[0].mxu0 %v1184
    %v1252 = vpop.f32.mrb[0].mxu0
    %v1253 = vadd.f32 0.0, %v1252
    %v1254 = vpop.f32.mrb[0].mxu0
    %1255 = vdwg.mxu0
    %1256 = vrot.lane.b32.xlu0 %v143, 56
    %v1257 = vpop.permute.xlu0 %1256
    %v1260 = vsel %vm147, %v852, 0
    %1262 = vmatprep.subr.mxu0 0.0
    %1263 = vmatpush1.msra.mxu0 %v1257
    %1264 = vmatprep.subr.mxu0 0.0
    %1265 = vmatpush1.msra.mxu0 0.0
    %1266 = vmatprep.subr.mxu0 0.0
    %1267 = vmatpush1.msra.mxu0 0.0
    %1268 = vmatprep.subr.mxu0 0.0
    %1269 = vmatpush1.msra.mxu0 0.0
    %1270 = vmatprep.subr.mxu0 0.0
    %1271 = vmatpush1.msra.mxu0 0.0
    %1272 = vmatprep.subr.mxu0 0.0
    %1273 = vmatpush1.msra.mxu0 0.0
    %1274 = vmatprep.subr.mxu0 0.0
    %1275 = vmatpush1.msra.mxu0 0.0
    %1276 = vmatprep.subr.mxu0 0.0
    %1277 = vmatpush1.msra.mxu0 0.0
    %1278 = vmatprep.subr.mxu0 0.0
    %1279 = vmatpush1.msra.mxu0 0.0
    %1280 = vmatprep.subr.mxu0 0.0
    %1281 = vmatpush1.msra.mxu0 0.0
    %1282 = vmatprep.subr.mxu0 0.0
    %1283 = vmatpush1.msra.mxu0 0.0
    %1284 = vmatprep.subr.mxu0 0.0
    %1285 = vmatpush1.msra.mxu0 0.0
    %1286 = vmatprep.subr.mxu0 0.0
    %1287 = vmatpush1.msra.mxu0 0.0
    %1288 = vmatprep.subr.mxu0 0.0
    %1289 = vmatpush1.msra.mxu0 0.0
    %1290 = vmatprep.subr.mxu0 0.0
    %1291 = vmatpush1.msra.mxu0 0.0
    %1292 = vmatprep.subr.mxu0 0.0
    %1293 = vmatpush1.msra.mxu0 0.0
    %1294 = vmatprep.subr.mxu0 0.0
    %1295 = vmatpush1.msra.mxu0 0.0
    %1296 = vmatprep.subr.mxu0 0.0
    %1297 = vmatpush1.msra.mxu0 0.0
    %1298 = vmatprep.subr.mxu0 0.0
    %1299 = vmatpush1.msra.mxu0 0.0
    %1300 = vmatprep.subr.mxu0 0.0
    %1301 = vmatpush1.msra.mxu0 0.0
    %1302 = vmatprep.subr.mxu0 0.0
    %1303 = vmatpush1.msra.mxu0 0.0
    %1304 = vmatprep.subr.mxu0 0.0
    %1305 = vmatpush1.msra.mxu0 0.0
    %1306 = vmatprep.subr.mxu0 0.0
    %1307 = vmatpush1.msra.mxu0 0.0
    %1308 = vmatprep.subr.mxu0 0.0
    %1309 = vmatpush1.msra.mxu0 0.0
    %1310 = vmatprep.subr.mxu0 0.0
    %1311 = vmatpush1.msra.mxu0 0.0
    %1312 = vmatprep.subr.mxu0 0.0
    %1313 = vmatpush1.msra.mxu0 0.0
    %1314 = vmatprep.subr.mxu0 0.0
    %1315 = vmatpush1.msra.mxu0 0.0
    %1316 = vmatprep.subr.mxu0 0.0
    %1317 = vmatpush1.msra.mxu0 0.0
    %1318 = vmatprep.subr.mxu0 0.0
    %1319 = vmatpush1.msra.mxu0 0.0
    %1320 = vmatprep.subr.mxu0 0.0
    %1321 = vmatpush1.msra.mxu0 0.0
    %1322 = vmatprep.subr.mxu0 0.0
    %1323 = vmatpush1.msra.mxu0 0.0
    %1324 = vmatprep.subr.mxu0 0.0
    %1325 = vmatpush1.msra.mxu0 0.0
    %1326 = vmatprep.mubr.f32.mxu0 0.0
    %1327 = vmatmul.mubr.f32.gmra.mrb[0].mxu0 %v1260
    %v1328 = vpop.f32.mrb[0].mxu0
    %v1329 = vadd.f32 0.0, %v1328
    %v1330 = vpop.f32.mrb[0].mxu0
    %1331 = vdwg.mxu0
    %1332 = vrot.lane.b32.xlu0 %v143, 48
    %v1333 = vpop.permute.xlu0 %1332
    %v1336 = vsel %vm147, %v854, 0
    %1338 = vmatprep.subr.mxu0 0.0
    %1339 = vmatpush1.msra.mxu0 %v1333
    %1340 = vmatprep.subr.mxu0 0.0
    %1341 = vmatpush1.msra.mxu0 0.0
    %1342 = vmatprep.subr.mxu0 0.0
    %1343 = vmatpush1.msra.mxu0 0.0
    %1344 = vmatprep.subr.mxu0 0.0
    %1345 = vmatpush1.msra.mxu0 0.0
    %1346 = vmatprep.subr.mxu0 0.0
    %1347 = vmatpush1.msra.mxu0 0.0
    %1348 = vmatprep.subr.mxu0 0.0
    %1349 = vmatpush1.msra.mxu0 0.0
    %1350 = vmatprep.subr.mxu0 0.0
    %1351 = vmatpush1.msra.mxu0 0.0
    %1352 = vmatprep.subr.mxu0 0.0
    %1353 = vmatpush1.msra.mxu0 0.0
    %1354 = vmatprep.subr.mxu0 0.0
    %1355 = vmatpush1.msra.mxu0 0.0
    %1356 = vmatprep.subr.mxu0 0.0
    %1357 = vmatpush1.msra.mxu0 0.0
    %1358 = vmatprep.subr.mxu0 0.0
    %1359 = vmatpush1.msra.mxu0 0.0
    %1360 = vmatprep.subr.mxu0 0.0
    %1361 = vmatpush1.msra.mxu0 0.0
    %1362 = vmatprep.subr.mxu0 0.0
    %1363 = vmatpush1.msra.mxu0 0.0
    %1364 = vmatprep.subr.mxu0 0.0
    %1365 = vmatpush1.msra.mxu0 0.0
    %1366 = vmatprep.subr.mxu0 0.0
    %1367 = vmatpush1.msra.mxu0 0.0
    %1368 = vmatprep.subr.mxu0 0.0
    %1369 = vmatpush1.msra.mxu0 0.0
    %1370 = vmatprep.subr.mxu0 0.0
    %1371 = vmatpush1.msra.mxu0 0.0
    %1372 = vmatprep.subr.mxu0 0.0
    %1373 = vmatpush1.msra.mxu0 0.0
    %1374 = vmatprep.subr.mxu0 0.0
    %1375 = vmatpush1.msra.mxu0 0.0
    %1376 = vmatprep.subr.mxu0 0.0
    %1377 = vmatpush1.msra.mxu0 0.0
    %1378 = vmatprep.subr.mxu0 0.0
    %1379 = vmatpush1.msra.mxu0 0.0
    %1380 = vmatprep.subr.mxu0 0.0
    %1381 = vmatpush1.msra.mxu0 0.0
    %1382 = vmatprep.subr.mxu0 0.0
    %1383 = vmatpush1.msra.mxu0 0.0
    %1384 = vmatprep.subr.mxu0 0.0
    %1385 = vmatpush1.msra.mxu0 0.0
    %1386 = vmatprep.subr.mxu0 0.0
    %1387 = vmatpush1.msra.mxu0 0.0
    %1388 = vmatprep.subr.mxu0 0.0
    %1389 = vmatpush1.msra.mxu0 0.0
    %1390 = vmatprep.subr.mxu0 0.0
    %1391 = vmatpush1.msra.mxu0 0.0
    %1392 = vmatprep.subr.mxu0 0.0
    %1393 = vmatpush1.msra.mxu0 0.0
    %1394 = vmatprep.subr.mxu0 0.0
    %1395 = vmatpush1.msra.mxu0 0.0
    %1396 = vmatprep.subr.mxu0 0.0
    %1397 = vmatpush1.msra.mxu0 0.0
    %1398 = vmatprep.subr.mxu0 0.0
    %1399 = vmatpush1.msra.mxu0 0.0
    %1400 = vmatprep.subr.mxu0 0.0
    %1401 = vmatpush1.msra.mxu0 0.0
    %1402 = vmatprep.mubr.f32.mxu0 0.0
    %1403 = vmatmul.mubr.f32.gmra.mrb[0].mxu0 %v1336
    %v1404 = vpop.f32.mrb[0].mxu0
    %v1405 = vadd.f32 0.0, %v1404
    %v1406 = vpop.f32.mrb[0].mxu0
    %1407 = vdwg.mxu0
    %1408 = vrot.lane.b32.xlu0 %v143, 40
    %v1409 = vpop.permute.xlu0 %1408
    %v1412 = vsel %vm147, %v856, 0
    %1414 = vmatprep.subr.mxu0 0.0
    %1415 = vmatpush1.msra.mxu0 %v1409
    %1416 = vmatprep.subr.mxu0 0.0
    %1417 = vmatpush1.msra.mxu0 0.0
    %1418 = vmatprep.subr.mxu0 0.0
    %1419 = vmatpush1.msra.mxu0 0.0
    %1420 = vmatprep.subr.mxu0 0.0
    %1421 = vmatpush1.msra.mxu0 0.0
    %1422 = vmatprep.subr.mxu0 0.0
    %1423 = vmatpush1.msra.mxu0 0.0
    %1424 = vmatprep.subr.mxu0 0.0
    %1425 = vmatpush1.msra.mxu0 0.0
    %1426 = vmatprep.subr.mxu0 0.0
    %1427 = vmatpush1.msra.mxu0 0.0
    %1428 = vmatprep.subr.mxu0 0.0
    %1429 = vmatpush1.msra.mxu0 0.0
    %1430 = vmatprep.subr.mxu0 0.0
    %1431 = vmatpush1.msra.mxu0 0.0
    %1432 = vmatprep.subr.mxu0 0.0
    %1433 = vmatpush1.msra.mxu0 0.0
    %1434 = vmatprep.subr.mxu0 0.0
    %1435 = vmatpush1.msra.mxu0 0.0
    %1436 = vmatprep.subr.mxu0 0.0
    %1437 = vmatpush1.msra.mxu0 0.0
    %1438 = vmatprep.subr.mxu0 0.0
    %1439 = vmatpush1.msra.mxu0 0.0
    %1440 = vmatprep.subr.mxu0 0.0
    %1441 = vmatpush1.msra.mxu0 0.0
    %1442 = vmatprep.subr.mxu0 0.0
    %1443 = vmatpush1.msra.mxu0 0.0
    %1444 = vmatprep.subr.mxu0 0.0
    %1445 = vmatpush1.msra.mxu0 0.0
    %1446 = vmatprep.subr.mxu0 0.0
    %1447 = vmatpush1.msra.mxu0 0.0
    %1448 = vmatprep.subr.mxu0 0.0
    %1449 = vmatpush1.msra.mxu0 0.0
    %1450 = vmatprep.subr.mxu0 0.0
    %1451 = vmatpush1.msra.mxu0 0.0
    %1452 = vmatprep.subr.mxu0 0.0
    %1453 = vmatpush1.msra.mxu0 0.0
    %1454 = vmatprep.subr.mxu0 0.0
    %1455 = vmatpush1.msra.mxu0 0.0
    %1456 = vmatprep.subr.mxu0 0.0
    %1457 = vmatpush1.msra.mxu0 0.0
    %1458 = vmatprep.subr.mxu0 0.0
    %1459 = vmatpush1.msra.mxu0 0.0
    %1460 = vmatprep.subr.mxu0 0.0
    %1461 = vmatpush1.msra.mxu0 0.0
    %1462 = vmatprep.subr.mxu0 0.0
    %1463 = vmatpush1.msra.mxu0 0.0
    %1464 = vmatprep.subr.mxu0 0.0
    %1465 = vmatpush1.msra.mxu0 0.0
    %1466 = vmatprep.subr.mxu0 0.0
    %1467 = vmatpush1.msra.mxu0 0.0
    %1468 = vmatprep.subr.mxu0 0.0
    %1469 = vmatpush1.msra.mxu0 0.0
    %1470 = vmatprep.subr.mxu0 0.0
    %1471 = vmatpush1.msra.mxu0 0.0
    %1472 = vmatprep.subr.mxu0 0.0
    %1473 = vmatpush1.msra.mxu0 0.0
    %1474 = vmatprep.subr.mxu0 0.0
    %1475 = vmatpush1.msra.mxu0 0.0
    %1476 = vmatprep.subr.mxu0 0.0
    %1477 = vmatpush1.msra.mxu0 0.0
    %1478 = vmatprep.mubr.f32.mxu0 0.0
    %1479 = vmatmul.mubr.f32.gmra.mrb[0].mxu0 %v1412
    %v1480 = vpop.f32.mrb[0].mxu0
    %v1481 = vadd.f32 0.0, %v1480
    %v1482 = vpop.f32.mrb[0].mxu0
    %1483 = vdwg.mxu0
    %1485 = vrot.lane.b32.xlu0 %v1329, 8
    %v1486 = vpop.permute.xlu0 %1485
    %1489 = vrot.lane.b32.xlu0 %v1405, 16
    %v1490 = vpop.permute.xlu0 %1489
    %1493 = vrot.lane.b32.xlu0 %v1481, 24
    %v1494 = vpop.permute.xlu0 %1493
    %v1496 = vsel %vm147, %v1253, %v1486
    %v1497 = vsel %vm1175, %v1496, %v1490
    %v1498 = vsel %vm1177, %v1497, %v1494
    %v1499 = vld [vmem:[%s4 + $0x3] sm:$0x1]
    %v1500 = vlaneseq
    %v1501 = vshrl.u32 %v1500, 7
    %v1502 = vsub.s32 0, %v1501
    %v1503 = vrot.slane %v1499, %v1502
    %1508 = vrot.lane.b32.xlu0 %v27, 32
    %v1509 = vpop.permute.xlu0 %1508
    %1510 = vrot.lane.b32.xlu0 %v28, 32
    %v1511 = vpop.permute.xlu0 %1510
    %1512 = vrot.lane.b32.xlu0 %v29, 32
    %v1513 = vpop.permute.xlu0 %1512
    %1514 = vrot.lane.b32.xlu0 %v30, 32
    %v1515 = vpop.permute.xlu0 %1514
    %v1521 = vsel %vm31, %v1178, 0
    %v1524 = vsel %vm31, %v1498, 0
    %1526 = vmatprep.subr.mxu0 0.0
    %1527 = vmatpush1.msra.mxu0 %v1509
    %1528 = vmatprep.subr.mxu0 0.0
    %1529 = vmatpush1.msra.mxu0 %v1511
    %1530 = vmatprep.subr.mxu0 0.0
    %1531 = vmatpush1.msra.mxu0 %v1513
    %1532 = vmatprep.subr.mxu0 0.0
    %1533 = vmatpush1.msra.mxu0 %v1515
    %1534 = vmatprep.subr.mxu0 0.0
    %1535 = vmatpush1.msra.mxu0 0.0
    %1536 = vmatprep.subr.mxu0 0.0
    %1537 = vmatpush1.msra.mxu0 0.0
    %1538 = vmatprep.subr.mxu0 0.0
    %1539 = vmatpush1.msra.mxu0 0.0
    %1540 = vmatprep.subr.mxu0 0.0
    %1541 = vmatpush1.msra.mxu0 0.0
    %1542 = vmatprep.subr.mxu0 0.0
    %1543 = vmatpush1.msra.mxu0 0.0
    %1544 = vmatprep.subr.mxu0 0.0
    %1545 = vmatpush1.msra.mxu0 0.0
    %1546 = vmatprep.subr.mxu0 0.0
    %1547 = vmatpush1.msra.mxu0 0.0
    %1548 = vmatprep.subr.mxu0 0.0
    %1549 = vmatpush1.msra.mxu0 0.0
    %1550 = vmatprep.subr.mxu0 0.0
    %1551 = vmatpush1.msra.mxu0 0.0
    %1552 = vmatprep.subr.mxu0 0.0
    %1553 = vmatpush1.msra.mxu0 0.0
    %1554 = vmatprep.subr.mxu0 0.0
    %1555 = vmatpush1.msra.mxu0 0.0
    %1556 = vmatprep.subr.mxu0 0.0
    %1557 = vmatpush1.msra.mxu0 0.0
    %1558 = vmatprep.subr.mxu0 0.0
    %1559 = vmatpush1.msra.mxu0 0.0
    %1560 = vmatprep.subr.mxu0 0.0
    %1561 = vmatpush1.msra.mxu0 0.0
    %1562 = vmatprep.subr.mxu0 0.0
    %1563 = vmatpush1.msra.mxu0 0.0
    %1564 = vmatprep.subr.mxu0 0.0
    %1565 = vmatpush1.msra.mxu0 0.0
    %1566 = vmatprep.subr.mxu0 0.0
    %1567 = vmatpush1.msra.mxu0 0.0
    %1568 = vmatprep.subr.mxu0 0.0
    %1569 = vmatpush1.msra.mxu0 0.0
    %1570 = vmatprep.subr.mxu0 0.0
    %1571 = vmatpush1.msra.mxu0 0.0
    %1572 = vmatprep.subr.mxu0 0.0
    %1573 = vmatpush1.msra.mxu0 0.0
    %1574 = vmatprep.subr.mxu0 0.0
    %1575 = vmatpush1.msra.mxu0 0.0
    %1576 = vmatprep.subr.mxu0 0.0
    %1577 = vmatpush1.msra.mxu0 0.0
    %1578 = vmatprep.subr.mxu0 0.0
    %1579 = vmatpush1.msra.mxu0 0.0
    %1580 = vmatprep.subr.mxu0 0.0
    %1581 = vmatpush1.msra.mxu0 0.0
    %1582 = vmatprep.subr.mxu0 0.0
    %1583 = vmatpush1.msra.mxu0 0.0
    %1584 = vmatprep.subr.mxu0 0.0
    %1585 = vmatpush1.msra.mxu0 0.0
    %1586 = vmatprep.subr.mxu0 0.0
    %1587 = vmatpush1.msra.mxu0 0.0
    %1588 = vmatprep.subr.mxu0 0.0
    %1589 = vmatpush1.msra.mxu0 0.0
    %1590 = vmatprep.mubr.f32.mxu0 0.0
    %1591 = vmatmul.mubr.f32.gmra.mrb[0].mxu0 %v1521
    %v1592 = vpop.f32.mrb[0].mxu0
    %v1593 = vadd.f32 %v1503, %v1592
    %v1594 = vpop.f32.mrb[0].mxu0
    %1595 = vmatprep.mubr.f32.mxu0 0.0
    %1596 = vmatmul.mubr.f32.gmra.mrb[0].mxu0 %v1524
    %v1597 = vpop.f32.mrb[0].mxu0
    %v1598 = vadd.f32 %v1503, %v1597
    %v1599 = vpop.f32.mrb[0].mxu0
    %1600 = vdwg.mxu0
    %v1601 = vadd.f32 %v21, %v1593
    %v1602 = vadd.f32 %v22, %v1598
    %v1603 = vld [vmem:[%s4 + $0x5] sm:$0x1]
    %v1604 = vld [vmem:[%s4 + $0x6] sm:$0x1]
    %v1605 = vsel %vm31, %v1601, 0.0
    %1606 = vadd.xlane.f32.xlu0 %v1605
    %v1607 = vpop.xlane.xlu0 %1606
    %v1608 = vsel %vm31, %v1602, 0.0
    %1609 = vadd.xlane.f32.xlu0 %v1608
    %v1610 = vpop.xlane.xlu0 %1609
    %v1611 = vrcp.pop 32.0
    %v1612 = vmul.f32 %v1607, %v1611
    %v1613 = vmul.f32 %v1610, %v1611
    %v1614 = vsub.f32 %v1601, %v1612
    %v1615 = vsub.f32 %v1602, %v1613
    %v1616 = vmul.f32 %v1614, %v1614
    %v1617 = vmul.f32 %v1615, %v1615
    %v1618 = vsel %vm31, %v1616, 0.0
    %1619 = vadd.xlane.f32.xlu0 %v1618
    %v1620 = vpop.xlane.xlu0 %1619
    %v1621 = vsel %vm31, %v1617, 0.0
    %1622 = vadd.xlane.f32.xlu0 %v1621
    %v1623 = vpop.xlane.xlu0 %1622
    %v1624 = vmul.f32 %v1620, %v1611
    %v1625 = vmul.f32 %v1623, %v1611
    %v1626 = vadd.f32 %v1624, 1e-05
    %v1627 = vadd.f32 %v1625, 1e-05
    %v1628 = vrsqrt.pop %v1626
    %v1629 = vrsqrt.pop %v1627
    %v1630 = vmul.f32 %v1614, %v1628
    %v1631 = vmul.f32 %v1615, %v1629
    %v1632 = vlaneseq
    %v1633 = vshrl.u32 %v1632, 7
    %v1634 = vsub.s32 0, %v1633
    %v1635 = vrot.slane %v1603, %v1634
    %v1636 = vmul.f32 %v1630, %v1635
    %v1637 = vmul.f32 %v1631, %v1635
    %v1638 = vlaneseq
    %v1639 = vshrl.u32 %v1638, 7
    %v1640 = vsub.s32 0, %v1639
    %v1641 = vrot.slane %v1604, %v1640
    %v1642 = vadd.f32 %v1636, %v1641
    %v1643 = vadd.f32 %v1637, %v1641
    %v1644 = vld [vmem:[%s3] sm:$0x1]
    %v1646 = vlaneseq
    %v1647 = vshrl.u32 %v1646, 7
    %v1648 = vsub.s32 0, %v1647
    %v1649 = vrot.slane %v1644, %v1648
    %1651 = vmatprep.subr.mxu0 0.0
    %1652 = vmatpush1.msra.mxu0 %v23
    %1653 = vmatprep.subr.mxu0 0.0
    %1654 = vmatpush1.msra.mxu0 %v24
    %1655 = vmatprep.subr.mxu0 0.0
    %1656 = vmatpush1.msra.mxu0 %v25
    %1657 = vmatprep.subr.mxu0 0.0
    %1658 = vmatpush1.msra.mxu0 %v26
    %1659 = vmatprep.subr.mxu0 0.0
    %1660 = vmatpush1.msra.mxu0 0.0
    %1661 = vmatprep.subr.mxu0 0.0
    %1662 = vmatpush1.msra.mxu0 0.0
    %1663 = vmatprep.subr.mxu0 0.0
    %1664 = vmatpush1.msra.mxu0 0.0
    %1665 = vmatprep.subr.mxu0 0.0
    %1666 = vmatpush1.msra.mxu0 0.0
    %1667 = vmatprep.subr.mxu0 0.0
    %1668 = vmatpush1.msra.mxu0 0.0
    %1669 = vmatprep.subr.mxu0 0.0
    %1670 = vmatpush1.msra.mxu0 0.0
    %1671 = vmatprep.subr.mxu0 0.0
    %1672 = vmatpush1.msra.mxu0 0.0
    %1673 = vmatprep.subr.mxu0 0.0
    %1674 = vmatpush1.msra.mxu0 0.0
    %1675 = vmatprep.subr.mxu0 0.0
    %1676 = vmatpush1.msra.mxu0 0.0
    %1677 = vmatprep.subr.mxu0 0.0
    %1678 = vmatpush1.msra.mxu0 0.0
    %1679 = vmatprep.subr.mxu0 0.0
    %1680 = vmatpush1.msra.mxu0 0.0
    %1681 = vmatprep.subr.mxu0 0.0
    %1682 = vmatpush1.msra.mxu0 0.0
    %1683 = vmatprep.subr.mxu0 0.0
    %1684 = vmatpush1.msra.mxu0 0.0
    %1685 = vmatprep.subr.mxu0 0.0
    %1686 = vmatpush1.msra.mxu0 0.0
    %1687 = vmatprep.subr.mxu0 0.0
    %1688 = vmatpush1.msra.mxu0 0.0
    %1689 = vmatprep.subr.mxu0 0.0
    %1690 = vmatpush1.msra.mxu0 0.0
    %1691 = vmatprep.subr.mxu0 0.0
    %1692 = vmatpush1.msra.mxu0 0.0
    %1693 = vmatprep.subr.mxu0 0.0
    %1694 = vmatpush1.msra.mxu0 0.0
    %1695 = vmatprep.subr.mxu0 0.0
    %1696 = vmatpush1.msra.mxu0 0.0
    %1697 = vmatprep.subr.mxu0 0.0
    %1698 = vmatpush1.msra.mxu0 0.0
    %1699 = vmatprep.subr.mxu0 0.0
    %1700 = vmatpush1.msra.mxu0 0.0
    %1701 = vmatprep.subr.mxu0 0.0
    %1702 = vmatpush1.msra.mxu0 0.0
    %1703 = vmatprep.subr.mxu0 0.0
    %1704 = vmatpush1.msra.mxu0 0.0
    %1705 = vmatprep.subr.mxu0 0.0
    %1706 = vmatpush1.msra.mxu0 0.0
    %1707 = vmatprep.subr.mxu0 0.0
    %1708 = vmatpush1.msra.mxu0 0.0
    %1709 = vmatprep.subr.mxu0 0.0
    %1710 = vmatpush1.msra.mxu0 0.0
    %1711 = vmatprep.subr.mxu0 0.0
    %1712 = vmatpush1.msra.mxu0 0.0
    %1713 = vmatprep.subr.mxu0 0.0
    %1714 = vmatpush1.msra.mxu0 0.0
    %1715 = vmatprep.mubr.f32.mxu0 0.0
    %1716 = vmatmul.mubr.f32.gmra.mrb[0].mxu0 %v33
    %v1717 = vpop.f32.mrb[0].mxu0
    %v1718 = vadd.f32 %v1649, %v1717
    %v1719 = vpop.f32.mrb[0].mxu0
    %1720 = vmatprep.mubr.f32.mxu0 0.0
    %1721 = vmatmul.mubr.f32.gmra.mrb[0].mxu0 %v36
    %v1722 = vpop.f32.mrb[0].mxu0
    %v1723 = vadd.f32 %v1649, %v1722
    %v1724 = vpop.f32.mrb[0].mxu0
    %1725 = vdwg.mxu0
    %v1726 = vmax.f32 %v1718, 0.0
    %v1727 = vmax.f32 %v1723, 0.0
    %v1728 = vld [vmem:[%s2] sm:$0xff]
    %v1729 = vld [vmem:[%s2 + $0x8] sm:$0xff]
    %v1730 = vld [vmem:[%s2 + $0x10] sm:$0xff]
    %v1731 = vld [vmem:[%s2 + $0x18] sm:$0xff]
    %v1732 = vld [vmem:[%s2 + $0x20] sm:$0xff]
    %v1733 = vld [vmem:[%s2 + $0x28] sm:$0xff]
    %v1734 = vld [vmem:[%s2 + $0x30] sm:$0xff]
    %v1735 = vld [vmem:[%s2 + $0x38] sm:$0xff]
    %v1736 = vld [vmem:[%s2 + $0x40] sm:$0xff]
    %v1737 = vld [vmem:[%s2 + $0x48] sm:$0xff]
    %v1738 = vld [vmem:[%s2 + $0x50] sm:$0xff]
    %v1739 = vld [vmem:[%s2 + $0x58] sm:$0xff]
    %v1740 = vld [vmem:[%s2 + $0x60] sm:$0xff]
    %v1741 = vld [vmem:[%s2 + $0x68] sm:$0xff]
    %v1742 = vld [vmem:[%s2 + $0x70] sm:$0xff]
    %v1743 = vld [vmem:[%s2 + $0x78] sm:$0xff]
    %v1744 = vld [vmem:[%s4 + $0x4] sm:$0x1]
    %v1745 = vlaneseq
    %v1746 = vshrl.u32 %v1745, 7
    %v1747 = vsub.s32 0, %v1746
    %v1748 = vrot.slane %v1744, %v1747
    %1749 = vmatprep.subr.mxu0 0.0
    %1750 = vmatpush1.msra.mxu0 %v1728
    %1751 = vmatprep.subr.mxu0 0.0
    %1752 = vmatpush1.msra.mxu0 %v1729
    %1753 = vmatprep.subr.mxu0 0.0
    %1754 = vmatpush1.msra.mxu0 %v1730
    %1755 = vmatprep.subr.mxu0 0.0
    %1756 = vmatpush1.msra.mxu0 %v1731
    %1757 = vmatprep.subr.mxu0 0.0
    %1758 = vmatpush1.msra.mxu0 %v1732
    %1759 = vmatprep.subr.mxu0 0.0
    %1760 = vmatpush1.msra.mxu0 %v1733
    %1761 = vmatprep.subr.mxu0 0.0
    %1762 = vmatpush1.msra.mxu0 %v1734
    %1763 = vmatprep.subr.mxu0 0.0
    %1764 = vmatpush1.msra.mxu0 %v1735
    %1765 = vmatprep.subr.mxu0 0.0
    %1766 = vmatpush1.msra.mxu0 %v1736
    %1767 = vmatprep.subr.mxu0 0.0
    %1768 = vmatpush1.msra.mxu0 %v1737
    %1769 = vmatprep.subr.mxu0 0.0
    %1770 = vmatpush1.msra.mxu0 %v1738
    %1771 = vmatprep.subr.mxu0 0.0
    %1772 = vmatpush1.msra.mxu0 %v1739
    %1773 = vmatprep.subr.mxu0 0.0
    %1774 = vmatpush1.msra.mxu0 %v1740
    %1775 = vmatprep.subr.mxu0 0.0
    %1776 = vmatpush1.msra.mxu0 %v1741
    %1777 = vmatprep.subr.mxu0 0.0
    %1778 = vmatpush1.msra.mxu0 %v1742
    %1779 = vmatprep.subr.mxu0 0.0
    %1780 = vmatpush1.msra.mxu0 %v1743
    %1781 = vmatprep.subr.mxu0 0.0
    %1782 = vmatpush1.msra.mxu0 0.0
    %1783 = vmatprep.subr.mxu0 0.0
    %1784 = vmatpush1.msra.mxu0 0.0
    %1785 = vmatprep.subr.mxu0 0.0
    %1786 = vmatpush1.msra.mxu0 0.0
    %1787 = vmatprep.subr.mxu0 0.0
    %1788 = vmatpush1.msra.mxu0 0.0
    %1789 = vmatprep.subr.mxu0 0.0
    %1790 = vmatpush1.msra.mxu0 0.0
    %1791 = vmatprep.subr.mxu0 0.0
    %1792 = vmatpush1.msra.mxu0 0.0
    %1793 = vmatprep.subr.mxu0 0.0
    %1794 = vmatpush1.msra.mxu0 0.0
    %1795 = vmatprep.subr.mxu0 0.0
    %1796 = vmatpush1.msra.mxu0 0.0
    %1797 = vmatprep.subr.mxu0 0.0
    %1798 = vmatpush1.msra.mxu0 0.0
    %1799 = vmatprep.subr.mxu0 0.0
    %1800 = vmatpush1.msra.mxu0 0.0
    %1801 = vmatprep.subr.mxu0 0.0
    %1802 = vmatpush1.msra.mxu0 0.0
    %1803 = vmatprep.subr.mxu0 0.0
    %1804 = vmatpush1.msra.mxu0 0.0
    %1805 = vmatprep.subr.mxu0 0.0
    %1806 = vmatpush1.msra.mxu0 0.0
    %1807 = vmatprep.subr.mxu0 0.0
    %1808 = vmatpush1.msra.mxu0 0.0
    %1809 = vmatprep.subr.mxu0 0.0
    %1810 = vmatpush1.msra.mxu0 0.0
    %1811 = vmatprep.subr.mxu0 0.0
    %1812 = vmatpush1.msra.mxu0 0.0
    %1813 = vmatprep.mubr.f32.mxu0 0.0
    %1814 = vmatmul.mubr.f32.gmra.mrb[0].mxu0 %v1726
    %v1815 = vpop.f32.mrb[0].mxu0
    %v1816 = vadd.f32 %v1748, %v1815
    %v1817 = vpop.f32.mrb[0].mxu0
    %1818 = vmatprep.mubr.f32.mxu0 0.0
    %1819 = vmatmul.mubr.f32.gmra.mrb[0].mxu0 %v1727
    %v1820 = vpop.f32.mrb[0].mxu0
    %v1821 = vadd.f32 %v1748, %v1820
    %v1822 = vpop.f32.mrb[0].mxu0
    %1823 = vdwg.mxu0
    %v1824 = vadd.f32 %v1816, %v1642
    %v1825 = vadd.f32 %v1821, %v1643
    %v1826 = vld [vmem:[%s4 + $0x7] sm:$0x1]
    %v1827 = vld [vmem:[%s4 + $0x8] sm:$0x1]
    %v1828 = vsel %vm31, %v1824, 0.0
    %1829 = vadd.xlane.f32.xlu0 %v1828
    %v1830 = vpop.xlane.xlu0 %1829
    %v1831 = vsel %vm31, %v1825, 0.0
    %1832 = vadd.xlane.f32.xlu0 %v1831
    %v1833 = vpop.xlane.xlu0 %1832
    %v1834 = vmul.f32 %v1830, %v1611
    %v1835 = vmul.f32 %v1833, %v1611
    %v1836 = vsub.f32 %v1824, %v1834
    %v1837 = vsub.f32 %v1825, %v1835
    %v1838 = vmul.f32 %v1836, %v1836
    %v1839 = vmul.f32 %v1837, %v1837
    %v1840 = vsel %vm31, %v1838, 0.0
    %1841 = vadd.xlane.f32.xlu0 %v1840
    %v1842 = vpop.xlane.xlu0 %1841
    %v1843 = vsel %vm31, %v1839, 0.0
    %1844 = vadd.xlane.f32.xlu0 %v1843
    %v1845 = vpop.xlane.xlu0 %1844
    %v1846 = vmul.f32 %v1842, %v1611
    %v1847 = vmul.f32 %v1845, %v1611
    %v1848 = vadd.f32 %v1846, 1e-05
    %v1849 = vadd.f32 %v1847, 1e-05
    %v1850 = vrsqrt.pop %v1848
    %v1851 = vrsqrt.pop %v1849
    %v1852 = vmul.f32 %v1836, %v1850
    %v1853 = vmul.f32 %v1837, %v1851
    %v1854 = vlaneseq
    %v1855 = vshrl.u32 %v1854, 7
    %v1856 = vsub.s32 0, %v1855
    %v1857 = vrot.slane %v1826, %v1856
    %v1858 = vmul.f32 %v1852, %v1857
    %v1859 = vmul.f32 %v1853, %v1857
    %v1860 = vlaneseq
    %v1861 = vshrl.u32 %v1860, 7
    %v1862 = vsub.s32 0, %v1861
    %v1863 = vrot.slane %v1827, %v1862
    %v1864 = vadd.f32 %v1858, %v1863
    %v1865 = vadd.f32 %v1859, %v1863
    %1866 = vst.msk [vmem:[#allocation2] sm:$0xff] %vm31, %v1864
    %1867 = vst.msk [vmem:[#allocation2 + $0x8] sm:$0xff] %vm31, %v1865
    // Predicated region
    $region22: #{tpu_custom_call.1} parent=1 // pred_check
      _
    $region23: #{tpu_custom_call.1} parent=1 // pred_check_branch
      %1869 = sbr.rel (0) target = $region25
    $region24: #{tpu_custom_call.1} parent=1 // pred_region
      %s1871 = ssub.s32 256, 256
      %1872 = vsyncadd [#allocation3], %s1871
      %s1873 = sshll.u32 [#allocation2], 4
      %s1874 = int_to_ptr.vmem [resolvable:$true] %s1873
      %1879 = dma.vmem_to_hbm [thread:$0]  %s1874, 256, %s5, [#allocation3], 128, 128, 8
    $region25: #{tpu_custom_call.1} parent=1 // pred_fallthru
      _
    // Predicated region
    $region26: #{tpu_custom_call.1} parent=1 // pred_check
      _
    $region27: #{tpu_custom_call.1} parent=1 // pred_check_branch
      %1881 = sbr.rel (0) target = $region29
    $region28: #{tpu_custom_call.1} parent=1 // pred_region
      %1882 = dma.done [#allocation3], 256
    $region29: #{tpu_custom_call.1} parent=1 // pred_fallthru
      _
    %1883 = vsyncpa [#allocation3], 1

</llo_original>
